<compile_context>
chip_gen: v6e
topology: v6e:2x2x1
jax: 0.10.0
libtpu: 0.0.40
codegen_flags: <defaults>
</compile_context>

<pallas_src>
import functools
import math

import jax
import jax.numpy as jnp
from jax.experimental import pallas as pl
from jax.experimental.pallas import tpu as pltpu


# ----------------------------------------------------------------------------
# Numerics helpers (kernel-internal, f32).
# ----------------------------------------------------------------------------
def _expm1(v):
    # expm1(v) = 2*tanh(v/2) / (1 - tanh(v/2)); exact identity, no cancellation
    # near 0.  For the clamped v <= 0 branch, 1 - tanh(v/2) in [1, 2), so the
    # approx EUP reciprocal is safe.
    t = jnp.tanh(0.5 * v)
    return (2.0 * t) * pl.reciprocal(1.0 - t, approx=True)


def _elu(v):
    return jnp.where(v > 0, v, _expm1(jnp.minimum(v, 0.0)))


# ----------------------------------------------------------------------------
# Fused kernel: stacked LSTM over time + MLP head, all in VMEM.
# Gate order follows PyTorch: [i, f, g, o].
# ----------------------------------------------------------------------------
def _make_fused_kernel(T, B, H, layers_num):
    bf16 = jnp.bfloat16
    f32 = jnp.float32

    def kernel(x_ref, *refs):
        out_ref = refs[-1]
        lstm_refs = refs[:3 * layers_num]                 # (W_ih, W_hh, b) per layer
        w1_ref, b1_ref, w2_ref, b2_ref, w3_ref, b3_ref = refs[3 * layers_num:-1]

        # Layer input as a time-major (T*B, d_in) slab, f32.
        layer_in = x_ref[...]                             # (T*B, D_in)

        h = None
        for l in range(layers_num):
            # Weights / bias read from VMEM ONCE per layer (hoisted out of the
            # time loop).  Weights arrive pre-cast to bf16.
            w_ih = lstm_refs[3 * l][...]                  # (d_in, 4H) bf16
            w_hh = lstm_refs[3 * l + 1][...]              # (H,    4H) bf16
            b = lstm_refs[3 * l + 2][...]                 # (1,    4H) f32

            # Batched input->gate projection for ALL timesteps at once: this
            # matmul (M = T*B) is off the recurrent critical path.
            gx = jnp.dot(layer_in.astype(bf16), w_ih,
                         preferred_element_type=f32) + b  # (T*B, 4H) f32

            h = jnp.zeros((B, H), f32)
            c = jnp.zeros((B, H), f32)
            h_steps = []
            # Fully static unroll (T=8): per step only the K=H recurrent
            # matmul + gate math sits on the serial chain.
            for t in range(T):
                gates = gx[t * B:(t + 1) * B, :] + jnp.dot(
                    h.astype(bf16), w_hh, preferred_element_type=f32)  # (B, 4H)
                # Full-register nonlinearities (one vreg at B=2, H=32), then
                # post-activation H-wide slices.
                sg = jax.nn.sigmoid(gates)
                tg = jnp.tanh(gates)
                i_g = sg[:, 0 * H:1 * H]
                f_g = sg[:, 1 * H:2 * H]
                g_g = tg[:, 2 * H:3 * H]
                o_g = sg[:, 3 * H:4 * H]
                c = f_g * c + i_g * g_g
                h = o_g * jnp.tanh(c)
                if l < layers_num - 1:
                    h_steps.append(h)
            if l < layers_num - 1:
                # Inter-layer sequence stays in registers; becomes next layer's
                # batched-projection input.  (Dropout here is training-only.)
                layer_in = jnp.concatenate(h_steps, axis=0)     # (T*B, H)

        h_last = h                                        # == r_out[:, -1, :]

        # MLP head: Linear+ELU -> Linear+ELU -> Linear(->1).  bf16 operands,
        # f32 accumulation; ELU math in f32.
        y = _elu(jnp.dot(h_last.astype(bf16), w1_ref[...],
                         preferred_element_type=f32) + b1_ref[...])
        y = _elu(jnp.dot(y.astype(bf16), w2_ref[...],
                         preferred_element_type=f32) + b2_ref[...])
        out_ref[...] = jnp.dot(y.astype(bf16), w3_ref[...],
                               preferred_element_type=f32) + b3_ref[...]

    return kernel


# ----------------------------------------------------------------------------
# Parameter init (deterministic, PyTorch-style U(-1/sqrt(H), 1/sqrt(H))).
# LSTM weights are stored pre-transposed, SEPARATE W_ih / W_hh:
#   w_ih_l.T : (d_in, 4H),  w_hh_l.T : (H, 4H),  bias = b_ih + b_hh : (1, 4H).
# ----------------------------------------------------------------------------
def init_params(key, input_dim, hidden_dim, layers_num):
    k = 1.0 / math.sqrt(hidden_dim)
    params = {"lstm": []}
    for layer in range(layers_num):
        d_in = input_dim if layer == 0 else hidden_dim
        key, k1, k2, k3, k4 = jax.random.split(key, 5)
        w_ih = jax.random.uniform(k1, (4 * hidden_dim, d_in), jnp.float32, -k, k)
        w_hh = jax.random.uniform(k2, (4 * hidden_dim, hidden_dim), jnp.float32, -k, k)
        b_ih = jax.random.uniform(k3, (4 * hidden_dim,), jnp.float32, -k, k)
        b_hh = jax.random.uniform(k4, (4 * hidden_dim,), jnp.float32, -k, k)
        params["lstm"].append({
            "w_ih": w_ih.T,                                       # (d_in, 4H)
            "w_hh": w_hh.T,                                       # (H, 4H)
            "b": (b_ih + b_hh).reshape(1, 4 * hidden_dim),        # (1, 4H)
        })
    H, Hh = hidden_dim, hidden_dim // 2
    key, k1, k2, k3, k4, k5, k6 = jax.random.split(key, 7)
    kf1 = 1.0 / math.sqrt(H)
    kf2 = 1.0 / math.sqrt(H)
    kf3 = 1.0 / math.sqrt(Hh)
    params["w1"] = jax.random.uniform(k1, (H, H), jnp.float32, -kf1, kf1)
    params["b1"] = jax.random.uniform(k2, (1, H), jnp.float32, -kf1, kf1)
    params["w2"] = jax.random.uniform(k3, (H, Hh), jnp.float32, -kf2, kf2)
    params["b2"] = jax.random.uniform(k4, (1, Hh), jnp.float32, -kf2, kf2)
    params["w3"] = jax.random.uniform(k5, (Hh, 1), jnp.float32, -kf3, kf3)
    params["b3"] = jax.random.uniform(k6, (1, 1), jnp.float32, -kf3, kf3)
    return params


# ----------------------------------------------------------------------------
# Forward: (batch, time, input_dim) -> (batch, 1)  (CHOOSE != 'True' path).
# ----------------------------------------------------------------------------
@functools.partial(jax.jit, static_argnames=("layers_num",))
def rnn_forward(x_btd, params, layers_num):
    B, T, D = x_btd.shape
    H = params["w1"].shape[0]
    # Time-major, flattened to a (T*B, D) slab for the batched per-layer
    # input->gate projection inside the kernel.
    x = jnp.transpose(x_btd, (1, 0, 2)).reshape(T * B, D).astype(jnp.float32)

    bf16 = jnp.bfloat16
    args = [x]
    for p in params["lstm"]:
        # Weights pre-cast to bf16 at trace time; biases stay f32 (post-accum).
        args += [p["w_ih"].astype(bf16), p["w_hh"].astype(bf16), p["b"]]
    args += [params["w1"].astype(bf16), params["b1"],
             params["w2"].astype(bf16), params["b2"],
             params["w3"].astype(bf16), params["b3"]]

    kernel = _make_fused_kernel(T, B, H, layers_num)
    return pl.pallas_call(
        kernel,
        out_shape=jax.ShapeDtypeStruct((B, 1), jnp.float32),
        in_specs=[pl.BlockSpec(memory_space=pltpu.MemorySpace.VMEM)] * len(args),
        out_specs=pl.BlockSpec(memory_space=pltpu.MemorySpace.VMEM),
    )(*args)


if __name__ == "__main__":
    batch, time_step, input_dim = 2, 8, 8
    hidden_dim, layers_num = 32, 2

    key = jax.random.PRNGKey(0)
    key, pkey, xkey = jax.random.split(key, 3)
    params = init_params(pkey, input_dim, hidden_dim, layers_num)
    x = jax.random.normal(xkey, (batch, time_step, input_dim), jnp.float32)

    out = rnn_forward(x, params, layers_num)
    jax.block_until_ready(out)
    assert out.shape == (batch, 1), out.shape
    print("KERNEL_OK")
</pallas_src>

<mosaic_0001>
module attributes {stable_mosaic.version = 11 : i64} {
  func.func @kernel(%arg0: memref<16x8xf32, #tpu.memory_space<vmem>>, %arg1: memref<8x128xbf16, #tpu.memory_space<vmem>>, %arg2: memref<32x128xbf16, #tpu.memory_space<vmem>>, %arg3: memref<1x128xf32, #tpu.memory_space<vmem>>, %arg4: memref<32x128xbf16, #tpu.memory_space<vmem>>, %arg5: memref<32x128xbf16, #tpu.memory_space<vmem>>, %arg6: memref<1x128xf32, #tpu.memory_space<vmem>>, %arg7: memref<32x32xbf16, #tpu.memory_space<vmem>>, %arg8: memref<1x32xf32, #tpu.memory_space<vmem>>, %arg9: memref<32x16xbf16, #tpu.memory_space<vmem>>, %arg10: memref<1x16xf32, #tpu.memory_space<vmem>>, %arg11: memref<16x1xbf16, #tpu.memory_space<vmem>>, %arg12: memref<1x1xf32, #tpu.memory_space<vmem>>, %arg13: memref<2x1xf32, #tpu.memory_space<vmem>>) attributes {dimension_semantics = [], scalar_prefetch = 0 : i64, scratch_operands = 0 : i64, tpu.core_type = #tpu.core_type<tc>} {
    %c0 = arith.constant 0 : index
    %c0_0 = arith.constant 0 : index
    %0 = vector.load %arg0[%c0, %c0_0] : memref<16x8xf32, #tpu.memory_space<vmem>>, vector<16x8xf32>
    %c0_1 = arith.constant 0 : index
    %c0_2 = arith.constant 0 : index
    %1 = vector.load %arg1[%c0_1, %c0_2] : memref<8x128xbf16, #tpu.memory_space<vmem>>, vector<8x128xbf16>
    %c0_3 = arith.constant 0 : index
    %c0_4 = arith.constant 0 : index
    %2 = vector.load %arg2[%c0_3, %c0_4] : memref<32x128xbf16, #tpu.memory_space<vmem>>, vector<32x128xbf16>
    %c0_5 = arith.constant 0 : index
    %c0_6 = arith.constant 0 : index
    %3 = vector.load %arg3[%c0_5, %c0_6] : memref<1x128xf32, #tpu.memory_space<vmem>>, vector<1x128xf32>
    %4 = arith.truncf %0 : vector<16x8xf32> to vector<16x8xbf16>
    %cst = arith.constant dense<0.000000e+00> : vector<16x128xf32>
    %5 = tpu.matmul %4, %1, %cst {dimension_numbers = #tpu.dot_dimension_numbers<[1], [0], [0], [1], [0, 0, 1, 1], [], []>} : vector<16x8xbf16>, vector<8x128xbf16>, vector<16x128xf32> -> vector<16x128xf32>
    %6 = vector.broadcast %3 : vector<1x128xf32> to vector<16x128xf32>
    %7 = arith.addf %5, %6 : vector<16x128xf32>
    %cst_7 = arith.constant 0.000000e+00 : f32
    %8 = vector.broadcast %cst_7 : f32 to vector<2x32xf32>
    %cst_8 = arith.constant 0.000000e+00 : f32
    %9 = vector.broadcast %cst_8 : f32 to vector<2x32xf32>
    %10 = vector.extract_strided_slice %7 {offsets = [0, 0], sizes = [2, 128], strides = [1, 1]} : vector<16x128xf32> to vector<2x128xf32>
    %11 = arith.truncf %8 : vector<2x32xf32> to vector<2x32xbf16>
    %cst_9 = arith.constant dense<0.000000e+00> : vector<2x128xf32>
    %12 = tpu.matmul %11, %2, %cst_9 {dimension_numbers = #tpu.dot_dimension_numbers<[1], [0], [0], [1], [0, 0, 1, 1], [], []>} : vector<2x32xbf16>, vector<32x128xbf16>, vector<2x128xf32> -> vector<2x128xf32>
    %13 = arith.addf %10, %12 : vector<2x128xf32>
    %14 = arith.negf %13 : vector<2x128xf32>
    %15 = math.exp %14 : vector<2x128xf32>
    %cst_10 = arith.constant 1.000000e+00 : f32
    %16 = vector.broadcast %cst_10 : f32 to vector<2x128xf32>
    %17 = arith.addf %16, %15 : vector<2x128xf32>
    %18 = arith.divf %16, %17 : vector<2x128xf32>
    %19 = math.tanh %13 : vector<2x128xf32>
    %20 = vector.extract_strided_slice %18 {offsets = [0, 0], sizes = [2, 32], strides = [1, 1]} : vector<2x128xf32> to vector<2x32xf32>
    %21 = vector.extract_strided_slice %18 {offsets = [0, 32], sizes = [2, 32], strides = [1, 1]} : vector<2x128xf32> to vector<2x32xf32>
    %22 = vector.extract_strided_slice %19 {offsets = [0, 64], sizes = [2, 32], strides = [1, 1]} : vector<2x128xf32> to vector<2x32xf32>
    %23 = vector.extract_strided_slice %18 {offsets = [0, 96], sizes = [2, 32], strides = [1, 1]} : vector<2x128xf32> to vector<2x32xf32>
    %24 = arith.mulf %21, %9 : vector<2x32xf32>
    %25 = arith.mulf %20, %22 : vector<2x32xf32>
    %26 = arith.addf %24, %25 : vector<2x32xf32>
    %27 = math.tanh %26 : vector<2x32xf32>
    %28 = arith.mulf %23, %27 : vector<2x32xf32>
    %29 = vector.extract_strided_slice %7 {offsets = [2, 0], sizes = [2, 128], strides = [1, 1]} : vector<16x128xf32> to vector<2x128xf32>
    %30 = arith.truncf %28 : vector<2x32xf32> to vector<2x32xbf16>
    %cst_11 = arith.constant dense<0.000000e+00> : vector<2x128xf32>
    %31 = tpu.matmul %30, %2, %cst_11 {dimension_numbers = #tpu.dot_dimension_numbers<[1], [0], [0], [1], [0, 0, 1, 1], [], []>} : vector<2x32xbf16>, vector<32x128xbf16>, vector<2x128xf32> -> vector<2x128xf32>
    %32 = arith.addf %29, %31 : vector<2x128xf32>
    %33 = arith.negf %32 : vector<2x128xf32>
    %34 = math.exp %33 : vector<2x128xf32>
    %cst_12 = arith.constant 1.000000e+00 : f32
    %35 = vector.broadcast %cst_12 : f32 to vector<2x128xf32>
    %36 = arith.addf %35, %34 : vector<2x128xf32>
    %37 = arith.divf %35, %36 : vector<2x128xf32>
    %38 = math.tanh %32 : vector<2x128xf32>
    %39 = vector.extract_strided_slice %37 {offsets = [0, 0], sizes = [2, 32], strides = [1, 1]} : vector<2x128xf32> to vector<2x32xf32>
    %40 = vector.extract_strided_slice %37 {offsets = [0, 32], sizes = [2, 32], strides = [1, 1]} : vector<2x128xf32> to vector<2x32xf32>
    %41 = vector.extract_strided_slice %38 {offsets = [0, 64], sizes = [2, 32], strides = [1, 1]} : vector<2x128xf32> to vector<2x32xf32>
    %42 = vector.extract_strided_slice %37 {offsets = [0, 96], sizes = [2, 32], strides = [1, 1]} : vector<2x128xf32> to vector<2x32xf32>
    %43 = arith.mulf %40, %26 : vector<2x32xf32>
    %44 = arith.mulf %39, %41 : vector<2x32xf32>
    %45 = arith.addf %43, %44 : vector<2x32xf32>
    %46 = math.tanh %45 : vector<2x32xf32>
    %47 = arith.mulf %42, %46 : vector<2x32xf32>
    %48 = vector.extract_strided_slice %7 {offsets = [4, 0], sizes = [2, 128], strides = [1, 1]} : vector<16x128xf32> to vector<2x128xf32>
    %49 = arith.truncf %47 : vector<2x32xf32> to vector<2x32xbf16>
    %cst_13 = arith.constant dense<0.000000e+00> : vector<2x128xf32>
    %50 = tpu.matmul %49, %2, %cst_13 {dimension_numbers = #tpu.dot_dimension_numbers<[1], [0], [0], [1], [0, 0, 1, 1], [], []>} : vector<2x32xbf16>, vector<32x128xbf16>, vector<2x128xf32> -> vector<2x128xf32>
    %51 = arith.addf %48, %50 : vector<2x128xf32>
    %52 = arith.negf %51 : vector<2x128xf32>
    %53 = math.exp %52 : vector<2x128xf32>
    %cst_14 = arith.constant 1.000000e+00 : f32
    %54 = vector.broadcast %cst_14 : f32 to vector<2x128xf32>
    %55 = arith.addf %54, %53 : vector<2x128xf32>
    %56 = arith.divf %54, %55 : vector<2x128xf32>
    %57 = math.tanh %51 : vector<2x128xf32>
    %58 = vector.extract_strided_slice %56 {offsets = [0, 0], sizes = [2, 32], strides = [1, 1]} : vector<2x128xf32> to vector<2x32xf32>
    %59 = vector.extract_strided_slice %56 {offsets = [0, 32], sizes = [2, 32], strides = [1, 1]} : vector<2x128xf32> to vector<2x32xf32>
    %60 = vector.extract_strided_slice %57 {offsets = [0, 64], sizes = [2, 32], strides = [1, 1]} : vector<2x128xf32> to vector<2x32xf32>
    %61 = vector.extract_strided_slice %56 {offsets = [0, 96], sizes = [2, 32], strides = [1, 1]} : vector<2x128xf32> to vector<2x32xf32>
    %62 = arith.mulf %59, %45 : vector<2x32xf32>
    %63 = arith.mulf %58, %60 : vector<2x32xf32>
    %64 = arith.addf %62, %63 : vector<2x32xf32>
    %65 = math.tanh %64 : vector<2x32xf32>
    %66 = arith.mulf %61, %65 : vector<2x32xf32>
    %67 = vector.extract_strided_slice %7 {offsets = [6, 0], sizes = [2, 128], strides = [1, 1]} : vector<16x128xf32> to vector<2x128xf32>
    %68 = arith.truncf %66 : vector<2x32xf32> to vector<2x32xbf16>
    %cst_15 = arith.constant dense<0.000000e+00> : vector<2x128xf32>
    %69 = tpu.matmul %68, %2, %cst_15 {dimension_numbers = #tpu.dot_dimension_numbers<[1], [0], [0], [1], [0, 0, 1, 1], [], []>} : vector<2x32xbf16>, vector<32x128xbf16>, vector<2x128xf32> -> vector<2x128xf32>
    %70 = arith.addf %67, %69 : vector<2x128xf32>
    %71 = arith.negf %70 : vector<2x128xf32>
    %72 = math.exp %71 : vector<2x128xf32>
    %cst_16 = arith.constant 1.000000e+00 : f32
    %73 = vector.broadcast %cst_16 : f32 to vector<2x128xf32>
    %74 = arith.addf %73, %72 : vector<2x128xf32>
    %75 = arith.divf %73, %74 : vector<2x128xf32>
    %76 = math.tanh %70 : vector<2x128xf32>
    %77 = vector.extract_strided_slice %75 {offsets = [0, 0], sizes = [2, 32], strides = [1, 1]} : vector<2x128xf32> to vector<2x32xf32>
    %78 = vector.extract_strided_slice %75 {offsets = [0, 32], sizes = [2, 32], strides = [1, 1]} : vector<2x128xf32> to vector<2x32xf32>
    %79 = vector.extract_strided_slice %76 {offsets = [0, 64], sizes = [2, 32], strides = [1, 1]} : vector<2x128xf32> to vector<2x32xf32>
    %80 = vector.extract_strided_slice %75 {offsets = [0, 96], sizes = [2, 32], strides = [1, 1]} : vector<2x128xf32> to vector<2x32xf32>
    %81 = arith.mulf %78, %64 : vector<2x32xf32>
    %82 = arith.mulf %77, %79 : vector<2x32xf32>
    %83 = arith.addf %81, %82 : vector<2x32xf32>
    %84 = math.tanh %83 : vector<2x32xf32>
    %85 = arith.mulf %80, %84 : vector<2x32xf32>
    %86 = vector.extract_strided_slice %7 {offsets = [8, 0], sizes = [2, 128], strides = [1, 1]} : vector<16x128xf32> to vector<2x128xf32>
    %87 = arith.truncf %85 : vector<2x32xf32> to vector<2x32xbf16>
    %cst_17 = arith.constant dense<0.000000e+00> : vector<2x128xf32>
    %88 = tpu.matmul %87, %2, %cst_17 {dimension_numbers = #tpu.dot_dimension_numbers<[1], [0], [0], [1], [0, 0, 1, 1], [], []>} : vector<2x32xbf16>, vector<32x128xbf16>, vector<2x128xf32> -> vector<2x128xf32>
    %89 = arith.addf %86, %88 : vector<2x128xf32>
    %90 = arith.negf %89 : vector<2x128xf32>
    %91 = math.exp %90 : vector<2x128xf32>
    %cst_18 = arith.constant 1.000000e+00 : f32
    %92 = vector.broadcast %cst_18 : f32 to vector<2x128xf32>
    %93 = arith.addf %92, %91 : vector<2x128xf32>
    %94 = arith.divf %92, %93 : vector<2x128xf32>
    %95 = math.tanh %89 : vector<2x128xf32>
    %96 = vector.extract_strided_slice %94 {offsets = [0, 0], sizes = [2, 32], strides = [1, 1]} : vector<2x128xf32> to vector<2x32xf32>
    %97 = vector.extract_strided_slice %94 {offsets = [0, 32], sizes = [2, 32], strides = [1, 1]} : vector<2x128xf32> to vector<2x32xf32>
    %98 = vector.extract_strided_slice %95 {offsets = [0, 64], sizes = [2, 32], strides = [1, 1]} : vector<2x128xf32> to vector<2x32xf32>
    %99 = vector.extract_strided_slice %94 {offsets = [0, 96], sizes = [2, 32], strides = [1, 1]} : vector<2x128xf32> to vector<2x32xf32>
    %100 = arith.mulf %97, %83 : vector<2x32xf32>
    %101 = arith.mulf %96, %98 : vector<2x32xf32>
    %102 = arith.addf %100, %101 : vector<2x32xf32>
    %103 = math.tanh %102 : vector<2x32xf32>
    %104 = arith.mulf %99, %103 : vector<2x32xf32>
    %105 = vector.extract_strided_slice %7 {offsets = [10, 0], sizes = [2, 128], strides = [1, 1]} : vector<16x128xf32> to vector<2x128xf32>
    %106 = arith.truncf %104 : vector<2x32xf32> to vector<2x32xbf16>
    %cst_19 = arith.constant dense<0.000000e+00> : vector<2x128xf32>
    %107 = tpu.matmul %106, %2, %cst_19 {dimension_numbers = #tpu.dot_dimension_numbers<[1], [0], [0], [1], [0, 0, 1, 1], [], []>} : vector<2x32xbf16>, vector<32x128xbf16>, vector<2x128xf32> -> vector<2x128xf32>
    %108 = arith.addf %105, %107 : vector<2x128xf32>
    %109 = arith.negf %108 : vector<2x128xf32>
    %110 = math.exp %109 : vector<2x128xf32>
    %cst_20 = arith.constant 1.000000e+00 : f32
    %111 = vector.broadcast %cst_20 : f32 to vector<2x128xf32>
    %112 = arith.addf %111, %110 : vector<2x128xf32>
    %113 = arith.divf %111, %112 : vector<2x128xf32>
    %114 = math.tanh %108 : vector<2x128xf32>
    %115 = vector.extract_strided_slice %113 {offsets = [0, 0], sizes = [2, 32], strides = [1, 1]} : vector<2x128xf32> to vector<2x32xf32>
    %116 = vector.extract_strided_slice %113 {offsets = [0, 32], sizes = [2, 32], strides = [1, 1]} : vector<2x128xf32> to vector<2x32xf32>
    %117 = vector.extract_strided_slice %114 {offsets = [0, 64], sizes = [2, 32], strides = [1, 1]} : vector<2x128xf32> to vector<2x32xf32>
    %118 = vector.extract_strided_slice %113 {offsets = [0, 96], sizes = [2, 32], strides = [1, 1]} : vector<2x128xf32> to vector<2x32xf32>
    %119 = arith.mulf %116, %102 : vector<2x32xf32>
    %120 = arith.mulf %115, %117 : vector<2x32xf32>
    %121 = arith.addf %119, %120 : vector<2x32xf32>
    %122 = math.tanh %121 : vector<2x32xf32>
    %123 = arith.mulf %118, %122 : vector<2x32xf32>
    %124 = vector.extract_strided_slice %7 {offsets = [12, 0], sizes = [2, 128], strides = [1, 1]} : vector<16x128xf32> to vector<2x128xf32>
    %125 = arith.truncf %123 : vector<2x32xf32> to vector<2x32xbf16>
    %cst_21 = arith.constant dense<0.000000e+00> : vector<2x128xf32>
    %126 = tpu.matmul %125, %2, %cst_21 {dimension_numbers = #tpu.dot_dimension_numbers<[1], [0], [0], [1], [0, 0, 1, 1], [], []>} : vector<2x32xbf16>, vector<32x128xbf16>, vector<2x128xf32> -> vector<2x128xf32>
    %127 = arith.addf %124, %126 : vector<2x128xf32>
    %128 = arith.negf %127 : vector<2x128xf32>
    %129 = math.exp %128 : vector<2x128xf32>
    %cst_22 = arith.constant 1.000000e+00 : f32
    %130 = vector.broadcast %cst_22 : f32 to vector<2x128xf32>
    %131 = arith.addf %130, %129 : vector<2x128xf32>
    %132 = arith.divf %130, %131 : vector<2x128xf32>
    %133 = math.tanh %127 : vector<2x128xf32>
    %134 = vector.extract_strided_slice %132 {offsets = [0, 0], sizes = [2, 32], strides = [1, 1]} : vector<2x128xf32> to vector<2x32xf32>
    %135 = vector.extract_strided_slice %132 {offsets = [0, 32], sizes = [2, 32], strides = [1, 1]} : vector<2x128xf32> to vector<2x32xf32>
    %136 = vector.extract_strided_slice %133 {offsets = [0, 64], sizes = [2, 32], strides = [1, 1]} : vector<2x128xf32> to vector<2x32xf32>
    %137 = vector.extract_strided_slice %132 {offsets = [0, 96], sizes = [2, 32], strides = [1, 1]} : vector<2x128xf32> to vector<2x32xf32>
    %138 = arith.mulf %135, %121 : vector<2x32xf32>
    %139 = arith.mulf %134, %136 : vector<2x32xf32>
    %140 = arith.addf %138, %139 : vector<2x32xf32>
    %141 = math.tanh %140 : vector<2x32xf32>
    %142 = arith.mulf %137, %141 : vector<2x32xf32>
    %143 = vector.extract_strided_slice %7 {offsets = [14, 0], sizes = [2, 128], strides = [1, 1]} : vector<16x128xf32> to vector<2x128xf32>
    %144 = arith.truncf %142 : vector<2x32xf32> to vector<2x32xbf16>
    %cst_23 = arith.constant dense<0.000000e+00> : vector<2x128xf32>
    %145 = tpu.matmul %144, %2, %cst_23 {dimension_numbers = #tpu.dot_dimension_numbers<[1], [0], [0], [1], [0, 0, 1, 1], [], []>} : vector<2x32xbf16>, vector<32x128xbf16>, vector<2x128xf32> -> vector<2x128xf32>
    %146 = arith.addf %143, %145 : vector<2x128xf32>
    %147 = arith.negf %146 : vector<2x128xf32>
    %148 = math.exp %147 : vector<2x128xf32>
    %cst_24 = arith.constant 1.000000e+00 : f32
    %149 = vector.broadcast %cst_24 : f32 to vector<2x128xf32>
    %150 = arith.addf %149, %148 : vector<2x128xf32>
    %151 = arith.divf %149, %150 : vector<2x128xf32>
    %152 = math.tanh %146 : vector<2x128xf32>
    %153 = vector.extract_strided_slice %151 {offsets = [0, 0], sizes = [2, 32], strides = [1, 1]} : vector<2x128xf32> to vector<2x32xf32>
    %154 = vector.extract_strided_slice %151 {offsets = [0, 32], sizes = [2, 32], strides = [1, 1]} : vector<2x128xf32> to vector<2x32xf32>
    %155 = vector.extract_strided_slice %152 {offsets = [0, 64], sizes = [2, 32], strides = [1, 1]} : vector<2x128xf32> to vector<2x32xf32>
    %156 = vector.extract_strided_slice %151 {offsets = [0, 96], sizes = [2, 32], strides = [1, 1]} : vector<2x128xf32> to vector<2x32xf32>
    %157 = arith.mulf %154, %140 : vector<2x32xf32>
    %158 = arith.mulf %153, %155 : vector<2x32xf32>
    %159 = arith.addf %157, %158 : vector<2x32xf32>
    %160 = math.tanh %159 : vector<2x32xf32>
    %161 = arith.mulf %156, %160 : vector<2x32xf32>
    %162 = tpu.concatenate %28, %47, %66, %85, %104, %123, %142, %161 in 0 : vector<2x32xf32>, vector<2x32xf32>, vector<2x32xf32>, vector<2x32xf32>, vector<2x32xf32>, vector<2x32xf32>, vector<2x32xf32>, vector<2x32xf32> -> vector<16x32xf32>
    %c0_25 = arith.constant 0 : index
    %c0_26 = arith.constant 0 : index
    %163 = vector.load %arg4[%c0_25, %c0_26] : memref<32x128xbf16, #tpu.memory_space<vmem>>, vector<32x128xbf16>
    %c0_27 = arith.constant 0 : index
    %c0_28 = arith.constant 0 : index
    %164 = vector.load %arg5[%c0_27, %c0_28] : memref<32x128xbf16, #tpu.memory_space<vmem>>, vector<32x128xbf16>
    %c0_29 = arith.constant 0 : index
    %c0_30 = arith.constant 0 : index
    %165 = vector.load %arg6[%c0_29, %c0_30] : memref<1x128xf32, #tpu.memory_space<vmem>>, vector<1x128xf32>
    %166 = arith.truncf %162 : vector<16x32xf32> to vector<16x32xbf16>
    %cst_31 = arith.constant dense<0.000000e+00> : vector<16x128xf32>
    %167 = tpu.matmul %166, %163, %cst_31 {dimension_numbers = #tpu.dot_dimension_numbers<[1], [0], [0], [1], [0, 0, 1, 1], [], []>} : vector<16x32xbf16>, vector<32x128xbf16>, vector<16x128xf32> -> vector<16x128xf32>
    %168 = vector.broadcast %165 : vector<1x128xf32> to vector<16x128xf32>
    %169 = arith.addf %167, %168 : vector<16x128xf32>
    %cst_32 = arith.constant 0.000000e+00 : f32
    %170 = vector.broadcast %cst_32 : f32 to vector<2x32xf32>
    %cst_33 = arith.constant 0.000000e+00 : f32
    %171 = vector.broadcast %cst_33 : f32 to vector<2x32xf32>
    %172 = vector.extract_strided_slice %169 {offsets = [0, 0], sizes = [2, 128], strides = [1, 1]} : vector<16x128xf32> to vector<2x128xf32>
    %173 = arith.truncf %170 : vector<2x32xf32> to vector<2x32xbf16>
    %cst_34 = arith.constant dense<0.000000e+00> : vector<2x128xf32>
    %174 = tpu.matmul %173, %164, %cst_34 {dimension_numbers = #tpu.dot_dimension_numbers<[1], [0], [0], [1], [0, 0, 1, 1], [], []>} : vector<2x32xbf16>, vector<32x128xbf16>, vector<2x128xf32> -> vector<2x128xf32>
    %175 = arith.addf %172, %174 : vector<2x128xf32>
    %176 = arith.negf %175 : vector<2x128xf32>
    %177 = math.exp %176 : vector<2x128xf32>
    %cst_35 = arith.constant 1.000000e+00 : f32
    %178 = vector.broadcast %cst_35 : f32 to vector<2x128xf32>
    %179 = arith.addf %178, %177 : vector<2x128xf32>
    %180 = arith.divf %178, %179 : vector<2x128xf32>
    %181 = math.tanh %175 : vector<2x128xf32>
    %182 = vector.extract_strided_slice %180 {offsets = [0, 0], sizes = [2, 32], strides = [1, 1]} : vector<2x128xf32> to vector<2x32xf32>
    %183 = vector.extract_strided_slice %180 {offsets = [0, 32], sizes = [2, 32], strides = [1, 1]} : vector<2x128xf32> to vector<2x32xf32>
    %184 = vector.extract_strided_slice %181 {offsets = [0, 64], sizes = [2, 32], strides = [1, 1]} : vector<2x128xf32> to vector<2x32xf32>
    %185 = vector.extract_strided_slice %180 {offsets = [0, 96], sizes = [2, 32], strides = [1, 1]} : vector<2x128xf32> to vector<2x32xf32>
    %186 = arith.mulf %183, %171 : vector<2x32xf32>
    %187 = arith.mulf %182, %184 : vector<2x32xf32>
    %188 = arith.addf %186, %187 : vector<2x32xf32>
    %189 = math.tanh %188 : vector<2x32xf32>
    %190 = arith.mulf %185, %189 : vector<2x32xf32>
    %191 = vector.extract_strided_slice %169 {offsets = [2, 0], sizes = [2, 128], strides = [1, 1]} : vector<16x128xf32> to vector<2x128xf32>
    %192 = arith.truncf %190 : vector<2x32xf32> to vector<2x32xbf16>
    %cst_36 = arith.constant dense<0.000000e+00> : vector<2x128xf32>
    %193 = tpu.matmul %192, %164, %cst_36 {dimension_numbers = #tpu.dot_dimension_numbers<[1], [0], [0], [1], [0, 0, 1, 1], [], []>} : vector<2x32xbf16>, vector<32x128xbf16>, vector<2x128xf32> -> vector<2x128xf32>
    %194 = arith.addf %191, %193 : vector<2x128xf32>
    %195 = arith.negf %194 : vector<2x128xf32>
    %196 = math.exp %195 : vector<2x128xf32>
    %cst_37 = arith.constant 1.000000e+00 : f32
    %197 = vector.broadcast %cst_37 : f32 to vector<2x128xf32>
    %198 = arith.addf %197, %196 : vector<2x128xf32>
    %199 = arith.divf %197, %198 : vector<2x128xf32>
    %200 = math.tanh %194 : vector<2x128xf32>
    %201 = vector.extract_strided_slice %199 {offsets = [0, 0], sizes = [2, 32], strides = [1, 1]} : vector<2x128xf32> to vector<2x32xf32>
    %202 = vector.extract_strided_slice %199 {offsets = [0, 32], sizes = [2, 32], strides = [1, 1]} : vector<2x128xf32> to vector<2x32xf32>
    %203 = vector.extract_strided_slice %200 {offsets = [0, 64], sizes = [2, 32], strides = [1, 1]} : vector<2x128xf32> to vector<2x32xf32>
    %204 = vector.extract_strided_slice %199 {offsets = [0, 96], sizes = [2, 32], strides = [1, 1]} : vector<2x128xf32> to vector<2x32xf32>
    %205 = arith.mulf %202, %188 : vector<2x32xf32>
    %206 = arith.mulf %201, %203 : vector<2x32xf32>
    %207 = arith.addf %205, %206 : vector<2x32xf32>
    %208 = math.tanh %207 : vector<2x32xf32>
    %209 = arith.mulf %204, %208 : vector<2x32xf32>
    %210 = vector.extract_strided_slice %169 {offsets = [4, 0], sizes = [2, 128], strides = [1, 1]} : vector<16x128xf32> to vector<2x128xf32>
    %211 = arith.truncf %209 : vector<2x32xf32> to vector<2x32xbf16>
    %cst_38 = arith.constant dense<0.000000e+00> : vector<2x128xf32>
    %212 = tpu.matmul %211, %164, %cst_38 {dimension_numbers = #tpu.dot_dimension_numbers<[1], [0], [0], [1], [0, 0, 1, 1], [], []>} : vector<2x32xbf16>, vector<32x128xbf16>, vector<2x128xf32> -> vector<2x128xf32>
    %213 = arith.addf %210, %212 : vector<2x128xf32>
    %214 = arith.negf %213 : vector<2x128xf32>
    %215 = math.exp %214 : vector<2x128xf32>
    %cst_39 = arith.constant 1.000000e+00 : f32
    %216 = vector.broadcast %cst_39 : f32 to vector<2x128xf32>
    %217 = arith.addf %216, %215 : vector<2x128xf32>
    %218 = arith.divf %216, %217 : vector<2x128xf32>
    %219 = math.tanh %213 : vector<2x128xf32>
    %220 = vector.extract_strided_slice %218 {offsets = [0, 0], sizes = [2, 32], strides = [1, 1]} : vector<2x128xf32> to vector<2x32xf32>
    %221 = vector.extract_strided_slice %218 {offsets = [0, 32], sizes = [2, 32], strides = [1, 1]} : vector<2x128xf32> to vector<2x32xf32>
    %222 = vector.extract_strided_slice %219 {offsets = [0, 64], sizes = [2, 32], strides = [1, 1]} : vector<2x128xf32> to vector<2x32xf32>
    %223 = vector.extract_strided_slice %218 {offsets = [0, 96], sizes = [2, 32], strides = [1, 1]} : vector<2x128xf32> to vector<2x32xf32>
    %224 = arith.mulf %221, %207 : vector<2x32xf32>
    %225 = arith.mulf %220, %222 : vector<2x32xf32>
    %226 = arith.addf %224, %225 : vector<2x32xf32>
    %227 = math.tanh %226 : vector<2x32xf32>
    %228 = arith.mulf %223, %227 : vector<2x32xf32>
    %229 = vector.extract_strided_slice %169 {offsets = [6, 0], sizes = [2, 128], strides = [1, 1]} : vector<16x128xf32> to vector<2x128xf32>
    %230 = arith.truncf %228 : vector<2x32xf32> to vector<2x32xbf16>
    %cst_40 = arith.constant dense<0.000000e+00> : vector<2x128xf32>
    %231 = tpu.matmul %230, %164, %cst_40 {dimension_numbers = #tpu.dot_dimension_numbers<[1], [0], [0], [1], [0, 0, 1, 1], [], []>} : vector<2x32xbf16>, vector<32x128xbf16>, vector<2x128xf32> -> vector<2x128xf32>
    %232 = arith.addf %229, %231 : vector<2x128xf32>
    %233 = arith.negf %232 : vector<2x128xf32>
    %234 = math.exp %233 : vector<2x128xf32>
    %cst_41 = arith.constant 1.000000e+00 : f32
    %235 = vector.broadcast %cst_41 : f32 to vector<2x128xf32>
    %236 = arith.addf %235, %234 : vector<2x128xf32>
    %237 = arith.divf %235, %236 : vector<2x128xf32>
    %238 = math.tanh %232 : vector<2x128xf32>
    %239 = vector.extract_strided_slice %237 {offsets = [0, 0], sizes = [2, 32], strides = [1, 1]} : vector<2x128xf32> to vector<2x32xf32>
    %240 = vector.extract_strided_slice %237 {offsets = [0, 32], sizes = [2, 32], strides = [1, 1]} : vector<2x128xf32> to vector<2x32xf32>
    %241 = vector.extract_strided_slice %238 {offsets = [0, 64], sizes = [2, 32], strides = [1, 1]} : vector<2x128xf32> to vector<2x32xf32>
    %242 = vector.extract_strided_slice %237 {offsets = [0, 96], sizes = [2, 32], strides = [1, 1]} : vector<2x128xf32> to vector<2x32xf32>
    %243 = arith.mulf %240, %226 : vector<2x32xf32>
    %244 = arith.mulf %239, %241 : vector<2x32xf32>
    %245 = arith.addf %243, %244 : vector<2x32xf32>
    %246 = math.tanh %245 : vector<2x32xf32>
    %247 = arith.mulf %242, %246 : vector<2x32xf32>
    %248 = vector.extract_strided_slice %169 {offsets = [8, 0], sizes = [2, 128], strides = [1, 1]} : vector<16x128xf32> to vector<2x128xf32>
    %249 = arith.truncf %247 : vector<2x32xf32> to vector<2x32xbf16>
    %cst_42 = arith.constant dense<0.000000e+00> : vector<2x128xf32>
    %250 = tpu.matmul %249, %164, %cst_42 {dimension_numbers = #tpu.dot_dimension_numbers<[1], [0], [0], [1], [0, 0, 1, 1], [], []>} : vector<2x32xbf16>, vector<32x128xbf16>, vector<2x128xf32> -> vector<2x128xf32>
    %251 = arith.addf %248, %250 : vector<2x128xf32>
    %252 = arith.negf %251 : vector<2x128xf32>
    %253 = math.exp %252 : vector<2x128xf32>
    %cst_43 = arith.constant 1.000000e+00 : f32
    %254 = vector.broadcast %cst_43 : f32 to vector<2x128xf32>
    %255 = arith.addf %254, %253 : vector<2x128xf32>
    %256 = arith.divf %254, %255 : vector<2x128xf32>
    %257 = math.tanh %251 : vector<2x128xf32>
    %258 = vector.extract_strided_slice %256 {offsets = [0, 0], sizes = [2, 32], strides = [1, 1]} : vector<2x128xf32> to vector<2x32xf32>
    %259 = vector.extract_strided_slice %256 {offsets = [0, 32], sizes = [2, 32], strides = [1, 1]} : vector<2x128xf32> to vector<2x32xf32>
    %260 = vector.extract_strided_slice %257 {offsets = [0, 64], sizes = [2, 32], strides = [1, 1]} : vector<2x128xf32> to vector<2x32xf32>
    %261 = vector.extract_strided_slice %256 {offsets = [0, 96], sizes = [2, 32], strides = [1, 1]} : vector<2x128xf32> to vector<2x32xf32>
    %262 = arith.mulf %259, %245 : vector<2x32xf32>
    %263 = arith.mulf %258, %260 : vector<2x32xf32>
    %264 = arith.addf %262, %263 : vector<2x32xf32>
    %265 = math.tanh %264 : vector<2x32xf32>
    %266 = arith.mulf %261, %265 : vector<2x32xf32>
    %267 = vector.extract_strided_slice %169 {offsets = [10, 0], sizes = [2, 128], strides = [1, 1]} : vector<16x128xf32> to vector<2x128xf32>
    %268 = arith.truncf %266 : vector<2x32xf32> to vector<2x32xbf16>
    %cst_44 = arith.constant dense<0.000000e+00> : vector<2x128xf32>
    %269 = tpu.matmul %268, %164, %cst_44 {dimension_numbers = #tpu.dot_dimension_numbers<[1], [0], [0], [1], [0, 0, 1, 1], [], []>} : vector<2x32xbf16>, vector<32x128xbf16>, vector<2x128xf32> -> vector<2x128xf32>
    %270 = arith.addf %267, %269 : vector<2x128xf32>
    %271 = arith.negf %270 : vector<2x128xf32>
    %272 = math.exp %271 : vector<2x128xf32>
    %cst_45 = arith.constant 1.000000e+00 : f32
    %273 = vector.broadcast %cst_45 : f32 to vector<2x128xf32>
    %274 = arith.addf %273, %272 : vector<2x128xf32>
    %275 = arith.divf %273, %274 : vector<2x128xf32>
    %276 = math.tanh %270 : vector<2x128xf32>
    %277 = vector.extract_strided_slice %275 {offsets = [0, 0], sizes = [2, 32], strides = [1, 1]} : vector<2x128xf32> to vector<2x32xf32>
    %278 = vector.extract_strided_slice %275 {offsets = [0, 32], sizes = [2, 32], strides = [1, 1]} : vector<2x128xf32> to vector<2x32xf32>
    %279 = vector.extract_strided_slice %276 {offsets = [0, 64], sizes = [2, 32], strides = [1, 1]} : vector<2x128xf32> to vector<2x32xf32>
    %280 = vector.extract_strided_slice %275 {offsets = [0, 96], sizes = [2, 32], strides = [1, 1]} : vector<2x128xf32> to vector<2x32xf32>
    %281 = arith.mulf %278, %264 : vector<2x32xf32>
    %282 = arith.mulf %277, %279 : vector<2x32xf32>
    %283 = arith.addf %281, %282 : vector<2x32xf32>
    %284 = math.tanh %283 : vector<2x32xf32>
    %285 = arith.mulf %280, %284 : vector<2x32xf32>
    %286 = vector.extract_strided_slice %169 {offsets = [12, 0], sizes = [2, 128], strides = [1, 1]} : vector<16x128xf32> to vector<2x128xf32>
    %287 = arith.truncf %285 : vector<2x32xf32> to vector<2x32xbf16>
    %cst_46 = arith.constant dense<0.000000e+00> : vector<2x128xf32>
    %288 = tpu.matmul %287, %164, %cst_46 {dimension_numbers = #tpu.dot_dimension_numbers<[1], [0], [0], [1], [0, 0, 1, 1], [], []>} : vector<2x32xbf16>, vector<32x128xbf16>, vector<2x128xf32> -> vector<2x128xf32>
    %289 = arith.addf %286, %288 : vector<2x128xf32>
    %290 = arith.negf %289 : vector<2x128xf32>
    %291 = math.exp %290 : vector<2x128xf32>
    %cst_47 = arith.constant 1.000000e+00 : f32
    %292 = vector.broadcast %cst_47 : f32 to vector<2x128xf32>
    %293 = arith.addf %292, %291 : vector<2x128xf32>
    %294 = arith.divf %292, %293 : vector<2x128xf32>
    %295 = math.tanh %289 : vector<2x128xf32>
    %296 = vector.extract_strided_slice %294 {offsets = [0, 0], sizes = [2, 32], strides = [1, 1]} : vector<2x128xf32> to vector<2x32xf32>
    %297 = vector.extract_strided_slice %294 {offsets = [0, 32], sizes = [2, 32], strides = [1, 1]} : vector<2x128xf32> to vector<2x32xf32>
    %298 = vector.extract_strided_slice %295 {offsets = [0, 64], sizes = [2, 32], strides = [1, 1]} : vector<2x128xf32> to vector<2x32xf32>
    %299 = vector.extract_strided_slice %294 {offsets = [0, 96], sizes = [2, 32], strides = [1, 1]} : vector<2x128xf32> to vector<2x32xf32>
    %300 = arith.mulf %297, %283 : vector<2x32xf32>
    %301 = arith.mulf %296, %298 : vector<2x32xf32>
    %302 = arith.addf %300, %301 : vector<2x32xf32>
    %303 = math.tanh %302 : vector<2x32xf32>
    %304 = arith.mulf %299, %303 : vector<2x32xf32>
    %305 = vector.extract_strided_slice %169 {offsets = [14, 0], sizes = [2, 128], strides = [1, 1]} : vector<16x128xf32> to vector<2x128xf32>
    %306 = arith.truncf %304 : vector<2x32xf32> to vector<2x32xbf16>
    %cst_48 = arith.constant dense<0.000000e+00> : vector<2x128xf32>
    %307 = tpu.matmul %306, %164, %cst_48 {dimension_numbers = #tpu.dot_dimension_numbers<[1], [0], [0], [1], [0, 0, 1, 1], [], []>} : vector<2x32xbf16>, vector<32x128xbf16>, vector<2x128xf32> -> vector<2x128xf32>
    %308 = arith.addf %305, %307 : vector<2x128xf32>
    %309 = arith.negf %308 : vector<2x128xf32>
    %310 = math.exp %309 : vector<2x128xf32>
    %cst_49 = arith.constant 1.000000e+00 : f32
    %311 = vector.broadcast %cst_49 : f32 to vector<2x128xf32>
    %312 = arith.addf %311, %310 : vector<2x128xf32>
    %313 = arith.divf %311, %312 : vector<2x128xf32>
    %314 = math.tanh %308 : vector<2x128xf32>
    %315 = vector.extract_strided_slice %313 {offsets = [0, 0], sizes = [2, 32], strides = [1, 1]} : vector<2x128xf32> to vector<2x32xf32>
    %316 = vector.extract_strided_slice %313 {offsets = [0, 32], sizes = [2, 32], strides = [1, 1]} : vector<2x128xf32> to vector<2x32xf32>
    %317 = vector.extract_strided_slice %314 {offsets = [0, 64], sizes = [2, 32], strides = [1, 1]} : vector<2x128xf32> to vector<2x32xf32>
    %318 = vector.extract_strided_slice %313 {offsets = [0, 96], sizes = [2, 32], strides = [1, 1]} : vector<2x128xf32> to vector<2x32xf32>
    %319 = arith.mulf %316, %302 : vector<2x32xf32>
    %320 = arith.mulf %315, %317 : vector<2x32xf32>
    %321 = arith.addf %319, %320 : vector<2x32xf32>
    %322 = math.tanh %321 : vector<2x32xf32>
    %323 = arith.mulf %318, %322 : vector<2x32xf32>
    %324 = arith.truncf %323 : vector<2x32xf32> to vector<2x32xbf16>
    %c0_50 = arith.constant 0 : index
    %c0_51 = arith.constant 0 : index
    %325 = vector.load %arg7[%c0_50, %c0_51] : memref<32x32xbf16, #tpu.memory_space<vmem>>, vector<32x32xbf16>
    %cst_52 = arith.constant dense<0.000000e+00> : vector<2x32xf32>
    %326 = tpu.matmul %324, %325, %cst_52 {dimension_numbers = #tpu.dot_dimension_numbers<[1], [0], [0], [1], [0, 0, 1, 1], [], []>} : vector<2x32xbf16>, vector<32x32xbf16>, vector<2x32xf32> -> vector<2x32xf32>
    %c0_53 = arith.constant 0 : index
    %c0_54 = arith.constant 0 : index
    %327 = vector.load %arg8[%c0_53, %c0_54] : memref<1x32xf32, #tpu.memory_space<vmem>>, vector<1x32xf32>
    %328 = vector.broadcast %327 : vector<1x32xf32> to vector<2x32xf32>
    %329 = arith.addf %326, %328 : vector<2x32xf32>
    %cst_55 = arith.constant 0.000000e+00 : f32
    %330 = vector.broadcast %cst_55 : f32 to vector<2x32xf32>
    %331 = arith.cmpf ogt, %329, %330 : vector<2x32xf32>
    %cst_56 = arith.constant 0.000000e+00 : f32
    %332 = vector.broadcast %cst_56 : f32 to vector<2x32xf32>
    %333 = arith.minimumf %329, %332 : vector<2x32xf32>
    %cst_57 = arith.constant 5.000000e-01 : f32
    %334 = vector.broadcast %cst_57 : f32 to vector<2x32xf32>
    %335 = arith.mulf %334, %333 : vector<2x32xf32>
    %336 = math.tanh %335 : vector<2x32xf32>
    %cst_58 = arith.constant 2.000000e+00 : f32
    %337 = vector.broadcast %cst_58 : f32 to vector<2x32xf32>
    %338 = arith.mulf %337, %336 : vector<2x32xf32>
    %cst_59 = arith.constant 1.000000e+00 : f32
    %339 = vector.broadcast %cst_59 : f32 to vector<2x32xf32>
    %340 = arith.subf %339, %336 : vector<2x32xf32>
    %341 = tpu.reciprocal %340 {approx = true} : vector<2x32xf32> -> vector<2x32xf32>
    %342 = arith.mulf %338, %341 : vector<2x32xf32>
    %343 = arith.select %331, %329, %342 : vector<2x32xi1>, vector<2x32xf32>
    %344 = arith.truncf %343 : vector<2x32xf32> to vector<2x32xbf16>
    %c0_60 = arith.constant 0 : index
    %c0_61 = arith.constant 0 : index
    %345 = vector.load %arg9[%c0_60, %c0_61] : memref<32x16xbf16, #tpu.memory_space<vmem>>, vector<32x16xbf16>
    %cst_62 = arith.constant dense<0.000000e+00> : vector<2x16xf32>
    %346 = tpu.matmul %344, %345, %cst_62 {dimension_numbers = #tpu.dot_dimension_numbers<[1], [0], [0], [1], [0, 0, 1, 1], [], []>} : vector<2x32xbf16>, vector<32x16xbf16>, vector<2x16xf32> -> vector<2x16xf32>
    %c0_63 = arith.constant 0 : index
    %c0_64 = arith.constant 0 : index
    %347 = vector.load %arg10[%c0_63, %c0_64] : memref<1x16xf32, #tpu.memory_space<vmem>>, vector<1x16xf32>
    %348 = vector.broadcast %347 : vector<1x16xf32> to vector<2x16xf32>
    %349 = arith.addf %346, %348 : vector<2x16xf32>
    %cst_65 = arith.constant 0.000000e+00 : f32
    %350 = vector.broadcast %cst_65 : f32 to vector<2x16xf32>
    %351 = arith.cmpf ogt, %349, %350 : vector<2x16xf32>
    %cst_66 = arith.constant 0.000000e+00 : f32
    %352 = vector.broadcast %cst_66 : f32 to vector<2x16xf32>
    %353 = arith.minimumf %349, %352 : vector<2x16xf32>
    %cst_67 = arith.constant 5.000000e-01 : f32
    %354 = vector.broadcast %cst_67 : f32 to vector<2x16xf32>
    %355 = arith.mulf %354, %353 : vector<2x16xf32>
    %356 = math.tanh %355 : vector<2x16xf32>
    %cst_68 = arith.constant 2.000000e+00 : f32
    %357 = vector.broadcast %cst_68 : f32 to vector<2x16xf32>
    %358 = arith.mulf %357, %356 : vector<2x16xf32>
    %cst_69 = arith.constant 1.000000e+00 : f32
    %359 = vector.broadcast %cst_69 : f32 to vector<2x16xf32>
    %360 = arith.subf %359, %356 : vector<2x16xf32>
    %361 = tpu.reciprocal %360 {approx = true} : vector<2x16xf32> -> vector<2x16xf32>
    %362 = arith.mulf %358, %361 : vector<2x16xf32>
    %363 = arith.select %351, %349, %362 : vector<2x16xi1>, vector<2x16xf32>
    %364 = arith.truncf %363 : vector<2x16xf32> to vector<2x16xbf16>
    %c0_70 = arith.constant 0 : index
    %c0_71 = arith.constant 0 : index
    %365 = vector.load %arg11[%c0_70, %c0_71] : memref<16x1xbf16, #tpu.memory_space<vmem>>, vector<16x1xbf16>
    %cst_72 = arith.constant dense<0.000000e+00> : vector<2x1xf32>
    %366 = tpu.matmul %364, %365, %cst_72 {dimension_numbers = #tpu.dot_dimension_numbers<[1], [0], [0], [1], [0, 0, 1, 1], [], []>} : vector<2x16xbf16>, vector<16x1xbf16>, vector<2x1xf32> -> vector<2x1xf32>
    %c0_73 = arith.constant 0 : index
    %c0_74 = arith.constant 0 : index
    %367 = vector.load %arg12[%c0_73, %c0_74] : memref<1x1xf32, #tpu.memory_space<vmem>>, vector<1x1xf32>
    %368 = vector.broadcast %367 : vector<1x1xf32> to vector<2x1xf32>
    %369 = arith.addf %366, %368 : vector<2x1xf32>
    %c0_75 = arith.constant 0 : index
    %c0_76 = arith.constant 0 : index
    %370 = vector.load %arg13[%c0_75, %c0_76] : memref<2x1xf32, #tpu.memory_space<vmem>>, vector<2x1xf32>
    tpu.vector_store %arg13[%c0_75, %c0_76], %369 {strides = array<i32>} : memref<2x1xf32, #tpu.memory_space<vmem>>, vector<2x1xf32>,
    return
  }
}

</mosaic_0001>

<llo_original>
// kernel: rnn_forward.1
$region0: #{rnn_forward.1}
  #allocation0 [shape = 'u32[]', space=smem, size = 0x4, offset = 0x4, fixed_abs, tag = 'smem constant byte address 0x4 - core index']
  #allocation1 [shape = 'u32[144,128]{1,0:T(1,128)}', space=vmem, size = 0x12000, scoped, tag = 'internal scratch']
  #allocation2 [shape = 'f32[1,1]{1,0:T(1,128)S(1)}', space=vmem, size = 0x200, scoped, tag = 'scoped memory for rnn_forward.1']
  %s0 = inlined_call_operand.vmem [shape: f32[16,8], index: 0, kind: input, shape index: {}]
  %s1 = inlined_call_operand.vmem [shape: bf16[8,128], index: 1, kind: input, shape index: {}]
  %s2 = inlined_call_operand.vmem [shape: bf16[32,128], index: 2, kind: input, shape index: {}]
  %s3 = inlined_call_operand.vmem [shape: f32[1,128], index: 3, kind: input, shape index: {}]
  %s4 = inlined_call_operand.vmem [shape: bf16[32,128], index: 4, kind: input, shape index: {}]
  %s5 = inlined_call_operand.vmem [shape: bf16[32,128], index: 5, kind: input, shape index: {}]
  %s6 = inlined_call_operand.vmem [shape: f32[1,128], index: 6, kind: input, shape index: {}]
  %s7 = inlined_call_operand.vmem [shape: bf16[32,32], index: 7, kind: input, shape index: {}]
  %s8 = inlined_call_operand.vmem [shape: f32[1,32], index: 8, kind: input, shape index: {}]
  %s9 = inlined_call_operand.vmem [shape: bf16[32,16], index: 9, kind: input, shape index: {}]
  %s10 = inlined_call_operand.vmem [shape: f32[1,16], index: 10, kind: input, shape index: {}]
  %s11 = inlined_call_operand.vmem [shape: bf16[16,1], index: 11, kind: input, shape index: {}]
  %s12 = inlined_call_operand.<no memory space> [shape: f32[1,1], index: 12, kind: input, shape index: {}]
  %s13 = inlined_call_operand.vmem [shape: f32[2,1], index: 13, kind: output, shape index: {}]
  %s14 = sld [smem:[#allocation0]]
  $region62: #{rnn_forward.1} parent=0
    _
  %s16 = ssub.s32 1, %s14
  %s17 = scalar_select 0, %s16, %s14
  %v18 = vstv %s12
  %19 = vst [vmem:[#allocation2] sm:$0x1] %v18
  // Predicated region
  $region2: #{rnn_forward.1} parent=0 // pred_check
    _
  $region3: #{rnn_forward.1} parent=0 // pred_check_branch
    %21 = sbr.rel (0) target = $region5
  $region4: #{rnn_forward.1} parent=0 // pred_region
    _
  $region5: #{rnn_forward.1} parent=0 // pred_fallthru
    _
  // Predicated region
  $region6: #{rnn_forward.1} parent=0 // pred_check
    _
  $region7: #{rnn_forward.1} parent=0 // pred_check_branch
    %23 = sbr.rel (0) target = $region9
  $region8: #{rnn_forward.1} parent=0 // pred_region
    _
  $region9: #{rnn_forward.1} parent=0 // pred_fallthru
    _
  // Predicated region
  $region10: #{rnn_forward.1} parent=0 // pred_check
    _
  $region11: #{rnn_forward.1} parent=0 // pred_check_branch
    %25 = sbr.rel (0) target = $region13
  $region12: #{rnn_forward.1} parent=0 // pred_region
    _
  $region13: #{rnn_forward.1} parent=0 // pred_fallthru
    _
  // Predicated region
  $region14: #{rnn_forward.1} parent=0 // pred_check
    _
  $region15: #{rnn_forward.1} parent=0 // pred_check_branch
    %27 = sbr.rel (0) target = $region17
  $region16: #{rnn_forward.1} parent=0 // pred_region
    _
  $region17: #{rnn_forward.1} parent=0 // pred_fallthru
    _
  // Predicated region
  $region18: #{rnn_forward.1} parent=0 // pred_check
    _
  $region19: #{rnn_forward.1} parent=0 // pred_check_branch
    %29 = sbr.rel (0) target = $region21
  $region20: #{rnn_forward.1} parent=0 // pred_region
    _
  $region21: #{rnn_forward.1} parent=0 // pred_fallthru
    _
  // Predicated region
  $region22: #{rnn_forward.1} parent=0 // pred_check
    _
  $region23: #{rnn_forward.1} parent=0 // pred_check_branch
    %31 = sbr.rel (0) target = $region25
  $region24: #{rnn_forward.1} parent=0 // pred_region
    _
  $region25: #{rnn_forward.1} parent=0 // pred_fallthru
    _
  // Predicated region
  $region26: #{rnn_forward.1} parent=0 // pred_check
    _
  $region27: #{rnn_forward.1} parent=0 // pred_check_branch
    %33 = sbr.rel (0) target = $region29
  $region28: #{rnn_forward.1} parent=0 // pred_region
    _
  $region29: #{rnn_forward.1} parent=0 // pred_fallthru
    _
  // Predicated region
  $region30: #{rnn_forward.1} parent=0 // pred_check
    _
  $region31: #{rnn_forward.1} parent=0 // pred_check_branch
    %35 = sbr.rel (0) target = $region33
  $region32: #{rnn_forward.1} parent=0 // pred_region
    _
  $region33: #{rnn_forward.1} parent=0 // pred_fallthru
    _
  // Predicated region
  $region34: #{rnn_forward.1} parent=0 // pred_check
    _
  $region35: #{rnn_forward.1} parent=0 // pred_check_branch
    %37 = sbr.rel (0) target = $region37
  $region36: #{rnn_forward.1} parent=0 // pred_region
    _
  $region37: #{rnn_forward.1} parent=0 // pred_fallthru
    _
  // Predicated region
  $region38: #{rnn_forward.1} parent=0 // pred_check
    _
  $region39: #{rnn_forward.1} parent=0 // pred_check_branch
    %39 = sbr.rel (0) target = $region41
  $region40: #{rnn_forward.1} parent=0 // pred_region
    _
  $region41: #{rnn_forward.1} parent=0 // pred_fallthru
    _
  // Predicated region
  $region42: #{rnn_forward.1} parent=0 // pred_check
    _
  $region43: #{rnn_forward.1} parent=0 // pred_check_branch
    %41 = sbr.rel (0) target = $region45
  $region44: #{rnn_forward.1} parent=0 // pred_region
    _
  $region45: #{rnn_forward.1} parent=0 // pred_fallthru
    _
  // Predicated region
  $region46: #{rnn_forward.1} parent=0 // pred_check
    _
  $region47: #{rnn_forward.1} parent=0 // pred_check_branch
    %43 = sbr.rel (0) target = $region49
  $region48: #{rnn_forward.1} parent=0 // pred_region
    _
  $region49: #{rnn_forward.1} parent=0 // pred_fallthru
    _
  // Predicated region
  $region50: #{rnn_forward.1} parent=0 // pred_check
    _
  $region51: #{rnn_forward.1} parent=0 // pred_check_branch
    %45 = sbr.rel (0) target = $region53
  $region52: #{rnn_forward.1} parent=0 // pred_region
    _
  $region53: #{rnn_forward.1} parent=0 // pred_fallthru
    _
  %v47 = vld [vmem:[%s0] sm:$0xff]
  %v48 = vld [vmem:[%s0 + $0x8] sm:$0xff]
  %v49 = vld [vmem:[%s1] sm:$0xf]
  %v50 = vld [vmem:[%s2] sm:$0xf]
  %v51 = vld [vmem:[%s2 + $0x4] sm:$0xf]
  %v52 = vld [vmem:[%s2 + $0x8] sm:$0xf]
  %v53 = vld [vmem:[%s2 + $0xc] sm:$0xf]
  %v54 = vld [vmem:[%s3] sm:$0x1]
  %v55 = vpack.c.bf16 %v48, %v47
  %v57 = vlaneseq
  %v58 = vshrl.u32 %v57, 7
  %v59 = vsub.s32 0, %v58
  %v60 = vrot.slane %v54, %v59
  %vm62 = vcmask 64512
  %v64 = vsel %vm62, %v55, 0
  %vm66 = vcmask 1043456
  %v68 = vsel %vm66, %v49, 0
  %70 = vmatprep.subr.bf16.mxu0 0
  %71 = vmatpush1.bf16.msra.mxu0 0
  %72 = vmatprep.subr.bf16.mxu0 0
  %73 = vmatpush1.bf16.msra.mxu0 0
  %74 = vmatprep.subr.bf16.mxu0 0
  %75 = vmatpush1.bf16.msra.mxu0 0
  %76 = vmatprep.subr.bf16.mxu0 0
  %77 = vmatpush1.bf16.msra.mxu0 0
  %78 = vmatprep.subr.bf16.mxu0 0
  %79 = vmatpush1.bf16.msra.mxu0 0
  %80 = vmatprep.subr.bf16.mxu0 0
  %81 = vmatpush1.bf16.msra.mxu0 0
  %82 = vmatprep.subr.bf16.mxu0 0
  %83 = vmatpush1.bf16.msra.mxu0 0
  %84 = vmatprep.subr.bf16.mxu0 0
  %85 = vmatpush1.bf16.msra.mxu0 %v68
  %86 = vmatprep.subr.bf16.mxu0 0
  %87 = vmatpush2.bf16.msra.mxu0 0
  %88 = vmatprep.subr.bf16.mxu0 0
  %89 = vmatpush2.bf16.msra.mxu0 0
  %90 = vmatprep.subr.bf16.mxu0 0
  %91 = vmatpush2.bf16.msra.mxu0 0
  %92 = vmatprep.subr.bf16.mxu0 0
  %93 = vmatpush2.bf16.msra.mxu0 0
  %94 = vmatprep.subr.bf16.mxu0 0
  %95 = vmatpush2.bf16.msra.mxu0 0
  %96 = vmatprep.subr.bf16.mxu0 0
  %97 = vmatpush2.bf16.msra.mxu0 0
  %98 = vmatprep.subr.bf16.mxu0 0
  %99 = vmatpush2.bf16.msra.mxu0 0
  %100 = vmatprep.subr.bf16.mxu0 0
  %101 = vmatpush2.bf16.msra.mxu0 0
  %102 = vmatprep.mubr.bf16.mxu0 0
  %103 = vmatmul.mubr.bf16.gmra.mxu0 %v64
  %v104 = vpop.f32.mrf.mxu0
  %v105 = vadd.f32 %v60, %v104
  %v106 = vpop.f32.mrf.mxu0
  %v107 = vpop.f32.mrf.mxu0
  %v108 = vadd.f32 %v60, %v107
  %v109 = vpop.f32.mrf.mxu0
  %110 = vdwg.mxu0
  %v115 = vunpack.c.l.b16 %v50
  %v116 = vunpack.c.l.b16 %v51
  %v117 = vunpack.c.l.b16 %v52
  %v118 = vunpack.c.l.b16 %v53
  %v119 = vpack.c.b16 %v116, %v115
  %v120 = vpack.c.b16 %v118, %v117
  %vm123 = vcmask 261120
  %v125 = vsel %vm123, 0, 0
  %127 = vmatprep.subr.bf16.mxu0 0
  %128 = vmatpush1.bf16.msra.mxu0 0
  %129 = vmatprep.subr.bf16.mxu0 0
  %130 = vmatpush1.bf16.msra.mxu0 0
  %131 = vmatprep.subr.bf16.mxu0 0
  %132 = vmatpush1.bf16.msra.mxu0 0
  %133 = vmatprep.subr.bf16.mxu0 0
  %134 = vmatpush1.bf16.msra.mxu0 0
  %135 = vmatprep.subr.bf16.mxu0 0
  %136 = vmatpush1.bf16.msra.mxu0 0
  %137 = vmatprep.subr.bf16.mxu0 0
  %138 = vmatpush1.bf16.msra.mxu0 0
  %139 = vmatprep.subr.bf16.mxu0 0
  %140 = vmatpush1.bf16.msra.mxu0 %v120
  %141 = vmatprep.subr.bf16.mxu0 0
  %142 = vmatpush1.bf16.msra.mxu0 %v119
  %143 = vmatprep.subr.bf16.mxu0 0
  %144 = vmatpush2.bf16.msra.mxu0 0
  %145 = vmatprep.subr.bf16.mxu0 0
  %146 = vmatpush2.bf16.msra.mxu0 0
  %147 = vmatprep.subr.bf16.mxu0 0
  %148 = vmatpush2.bf16.msra.mxu0 0
  %149 = vmatprep.subr.bf16.mxu0 0
  %150 = vmatpush2.bf16.msra.mxu0 0
  %151 = vmatprep.subr.bf16.mxu0 0
  %152 = vmatpush2.bf16.msra.mxu0 0
  %153 = vmatprep.subr.bf16.mxu0 0
  %154 = vmatpush2.bf16.msra.mxu0 0
  %155 = vmatprep.subr.bf16.mxu0 0
  %156 = vmatpush2.bf16.msra.mxu0 0
  %157 = vmatprep.subr.bf16.mxu0 0
  %158 = vmatpush2.bf16.msra.mxu0 0
  %159 = vmatprep.mubr.bf16.mxu0 0
  %160 = vmatmul.mubr.bf16.gmra.mxu0 %v125
  %v161 = vpop.f32.mrf.mxu0
  %v162 = vadd.f32 0.0, %v161
  %v163 = vpop.f32.mrf.mxu0
  %v164 = vpop.f32.mrf.mxu0
  %v165 = vpop.f32.mrf.mxu0
  %166 = vdwg.mxu0
  %v167 = vadd.f32 %v105, %v162
  %v168 = vxor.u32 %v167, 2147483648
  %v169 = vmul.f32 %v168, 1.442695
  %v170 = vpow.pop %v169
  %v171 = vadd.f32 %v170, 1.0
  %v172 = vrcp.pop %v171
  %v173 = vmul.f32 1.0, %v172
  %v174 = vtanh.pop %v167
  %v175 = vmul.f32 %v173, 0.0
  %177 = vrot.lane.b32.xlu0 %v174, 64
  %v178 = vpop.permute.xlu0 %177
  %v180 = vmul.f32 %v173, %v178
  %182 = vrot.lane.b32.xlu0 %v180, 32
  %v183 = vpop.permute.xlu0 %182
  %v185 = vadd.f32 %v175, %v183
  %v186 = vtanh.pop %v185
  %188 = vrot.lane.b32.xlu0 %v186, 64
  %v189 = vpop.permute.xlu0 %188
  %v191 = vmul.f32 %v173, %v189
  %v192 = vpack.c.bf16 %v191, %v191
  %194 = vrot.lane.b32.xlu0 %v192, 32
  %v195 = vpop.permute.xlu0 %194
  %v197 = vsel %vm123, %v195, 0
  %199 = vmatprep.subr.bf16.mxu0 0
  %200 = vmatpush1.bf16.msra.mxu0 0
  %201 = vmatprep.subr.bf16.mxu0 0
  %202 = vmatpush1.bf16.msra.mxu0 0
  %203 = vmatprep.subr.bf16.mxu0 0
  %204 = vmatpush1.bf16.msra.mxu0 0
  %205 = vmatprep.subr.bf16.mxu0 0
  %206 = vmatpush1.bf16.msra.mxu0 0
  %207 = vmatprep.subr.bf16.mxu0 0
  %208 = vmatpush1.bf16.msra.mxu0 0
  %209 = vmatprep.subr.bf16.mxu0 0
  %210 = vmatpush1.bf16.msra.mxu0 0
  %211 = vmatprep.subr.bf16.mxu0 0
  %212 = vmatpush1.bf16.msra.mxu0 %v120
  %213 = vmatprep.subr.bf16.mxu0 0
  %214 = vmatpush1.bf16.msra.mxu0 %v119
  %215 = vmatprep.subr.bf16.mxu0 0
  %216 = vmatpush2.bf16.msra.mxu0 0
  %217 = vmatprep.subr.bf16.mxu0 0
  %218 = vmatpush2.bf16.msra.mxu0 0
  %219 = vmatprep.subr.bf16.mxu0 0
  %220 = vmatpush2.bf16.msra.mxu0 0
  %221 = vmatprep.subr.bf16.mxu0 0
  %222 = vmatpush2.bf16.msra.mxu0 0
  %223 = vmatprep.subr.bf16.mxu0 0
  %224 = vmatpush2.bf16.msra.mxu0 0
  %225 = vmatprep.subr.bf16.mxu0 0
  %226 = vmatpush2.bf16.msra.mxu0 0
  %227 = vmatprep.subr.bf16.mxu0 0
  %228 = vmatpush2.bf16.msra.mxu0 0
  %229 = vmatprep.subr.bf16.mxu0 0
  %230 = vmatpush2.bf16.msra.mxu0 0
  %231 = vmatprep.mubr.bf16.mxu0 0
  %232 = vmatmul.mubr.bf16.gmra.mxu0 %v197
  %v233 = vpop.f32.mrf.mxu0
  %v234 = vadd.f32 0.0, %v233
  %v235 = vpop.f32.mrf.mxu0
  %v236 = vpop.f32.mrf.mxu0
  %v237 = vpop.f32.mrf.mxu0
  %238 = vdwg.mxu0
  %v240 = vrot.slane %v234, 6
  %v242 = vadd.f32 %v105, %v240
  %v243 = vxor.u32 %v242, 2147483648
  %v244 = vmul.f32 %v243, 1.442695
  %v245 = vpow.pop %v244
  %v246 = vadd.f32 %v245, 1.0
  %v247 = vrcp.pop %v246
  %v248 = vmul.f32 1.0, %v247
  %v249 = vtanh.pop %v242
  %v251 = vrot.slane %v185, 6
  %v253 = vmul.f32 %v248, %v251
  %255 = vrot.lane.b32.xlu0 %v249, 64
  %v256 = vpop.permute.xlu0 %255
  %v258 = vmul.f32 %v248, %v256
  %260 = vrot.lane.b32.xlu0 %v258, 32
  %v261 = vpop.permute.xlu0 %260
  %v263 = vadd.f32 %v253, %v261
  %v264 = vtanh.pop %v263
  %266 = vrot.lane.b32.xlu0 %v264, 64
  %v267 = vpop.permute.xlu0 %266
  %v269 = vmul.f32 %v248, %v267
  %v270 = vpack.c.bf16 %v269, %v269
  %v272 = vrot.slane %v270, 1
  %273 = vrot.lane.b32.xlu0 %v272, 32
  %v274 = vpop.permute.xlu0 %273
  %v276 = vsel %vm123, %v274, 0
  %278 = vmatprep.subr.bf16.mxu0 0
  %279 = vmatpush1.bf16.msra.mxu0 0
  %280 = vmatprep.subr.bf16.mxu0 0
  %281 = vmatpush1.bf16.msra.mxu0 0
  %282 = vmatprep.subr.bf16.mxu0 0
  %283 = vmatpush1.bf16.msra.mxu0 0
  %284 = vmatprep.subr.bf16.mxu0 0
  %285 = vmatpush1.bf16.msra.mxu0 0
  %286 = vmatprep.subr.bf16.mxu0 0
  %287 = vmatpush1.bf16.msra.mxu0 0
  %288 = vmatprep.subr.bf16.mxu0 0
  %289 = vmatpush1.bf16.msra.mxu0 0
  %290 = vmatprep.subr.bf16.mxu0 0
  %291 = vmatpush1.bf16.msra.mxu0 %v120
  %292 = vmatprep.subr.bf16.mxu0 0
  %293 = vmatpush1.bf16.msra.mxu0 %v119
  %294 = vmatprep.subr.bf16.mxu0 0
  %295 = vmatpush2.bf16.msra.mxu0 0
  %296 = vmatprep.subr.bf16.mxu0 0
  %297 = vmatpush2.bf16.msra.mxu0 0
  %298 = vmatprep.subr.bf16.mxu0 0
  %299 = vmatpush2.bf16.msra.mxu0 0
  %300 = vmatprep.subr.bf16.mxu0 0
  %301 = vmatpush2.bf16.msra.mxu0 0
  %302 = vmatprep.subr.bf16.mxu0 0
  %303 = vmatpush2.bf16.msra.mxu0 0
  %304 = vmatprep.subr.bf16.mxu0 0
  %305 = vmatpush2.bf16.msra.mxu0 0
  %306 = vmatprep.subr.bf16.mxu0 0
  %307 = vmatpush2.bf16.msra.mxu0 0
  %308 = vmatprep.subr.bf16.mxu0 0
  %309 = vmatpush2.bf16.msra.mxu0 0
  %310 = vmatprep.mubr.bf16.mxu0 0
  %311 = vmatmul.mubr.bf16.gmra.mxu0 %v276
  %v312 = vpop.f32.mrf.mxu0
  %v313 = vadd.f32 0.0, %v312
  %v314 = vpop.f32.mrf.mxu0
  %v315 = vpop.f32.mrf.mxu0
  %v316 = vpop.f32.mrf.mxu0
  %317 = vdwg.mxu0
  %v319 = vrot.slane %v313, 4
  %v321 = vadd.f32 %v105, %v319
  %v322 = vxor.u32 %v321, 2147483648
  %v323 = vmul.f32 %v322, 1.442695
  %v324 = vpow.pop %v323
  %v325 = vadd.f32 %v324, 1.0
  %v326 = vrcp.pop %v325
  %v327 = vmul.f32 1.0, %v326
  %v328 = vtanh.pop %v321
  %v330 = vrot.slane %v263, 6
  %v332 = vmul.f32 %v327, %v330
  %334 = vrot.lane.b32.xlu0 %v328, 64
  %v335 = vpop.permute.xlu0 %334
  %v337 = vmul.f32 %v327, %v335
  %339 = vrot.lane.b32.xlu0 %v337, 32
  %v340 = vpop.permute.xlu0 %339
  %v342 = vadd.f32 %v332, %v340
  %v343 = vtanh.pop %v342
  %345 = vrot.lane.b32.xlu0 %v343, 64
  %v346 = vpop.permute.xlu0 %345
  %v348 = vmul.f32 %v327, %v346
  %v349 = vpack.c.bf16 %v348, %v348
  %v351 = vrot.slane %v349, 2
  %352 = vrot.lane.b32.xlu0 %v351, 32
  %v353 = vpop.permute.xlu0 %352
  %v355 = vsel %vm123, %v353, 0
  %357 = vmatprep.subr.bf16.mxu0 0
  %358 = vmatpush1.bf16.msra.mxu0 0
  %359 = vmatprep.subr.bf16.mxu0 0
  %360 = vmatpush1.bf16.msra.mxu0 0
  %361 = vmatprep.subr.bf16.mxu0 0
  %362 = vmatpush1.bf16.msra.mxu0 0
  %363 = vmatprep.subr.bf16.mxu0 0
  %364 = vmatpush1.bf16.msra.mxu0 0
  %365 = vmatprep.subr.bf16.mxu0 0
  %366 = vmatpush1.bf16.msra.mxu0 0
  %367 = vmatprep.subr.bf16.mxu0 0
  %368 = vmatpush1.bf16.msra.mxu0 0
  %369 = vmatprep.subr.bf16.mxu0 0
  %370 = vmatpush1.bf16.msra.mxu0 %v120
  %371 = vmatprep.subr.bf16.mxu0 0
  %372 = vmatpush1.bf16.msra.mxu0 %v119
  %373 = vmatprep.subr.bf16.mxu0 0
  %374 = vmatpush2.bf16.msra.mxu0 0
  %375 = vmatprep.subr.bf16.mxu0 0
  %376 = vmatpush2.bf16.msra.mxu0 0
  %377 = vmatprep.subr.bf16.mxu0 0
  %378 = vmatpush2.bf16.msra.mxu0 0
  %379 = vmatprep.subr.bf16.mxu0 0
  %380 = vmatpush2.bf16.msra.mxu0 0
  %381 = vmatprep.subr.bf16.mxu0 0
  %382 = vmatpush2.bf16.msra.mxu0 0
  %383 = vmatprep.subr.bf16.mxu0 0
  %384 = vmatpush2.bf16.msra.mxu0 0
  %385 = vmatprep.subr.bf16.mxu0 0
  %386 = vmatpush2.bf16.msra.mxu0 0
  %387 = vmatprep.subr.bf16.mxu0 0
  %388 = vmatpush2.bf16.msra.mxu0 0
  %389 = vmatprep.mubr.bf16.mxu0 0
  %390 = vmatmul.mubr.bf16.gmra.mxu0 %v355
  %v391 = vpop.f32.mrf.mxu0
  %v392 = vadd.f32 0.0, %v391
  %v393 = vpop.f32.mrf.mxu0
  %v394 = vpop.f32.mrf.mxu0
  %v395 = vpop.f32.mrf.mxu0
  %396 = vdwg.mxu0
  %v398 = vrot.slane %v392, 2
  %v400 = vadd.f32 %v105, %v398
  %v401 = vxor.u32 %v400, 2147483648
  %v402 = vmul.f32 %v401, 1.442695
  %v403 = vpow.pop %v402
  %v404 = vadd.f32 %v403, 1.0
  %v405 = vrcp.pop %v404
  %v406 = vmul.f32 1.0, %v405
  %v407 = vtanh.pop %v400
  %v409 = vrot.slane %v342, 6
  %v411 = vmul.f32 %v406, %v409
  %413 = vrot.lane.b32.xlu0 %v407, 64
  %v414 = vpop.permute.xlu0 %413
  %v416 = vmul.f32 %v406, %v414
  %418 = vrot.lane.b32.xlu0 %v416, 32
  %v419 = vpop.permute.xlu0 %418
  %v421 = vadd.f32 %v411, %v419
  %v422 = vtanh.pop %v421
  %424 = vrot.lane.b32.xlu0 %v422, 64
  %v425 = vpop.permute.xlu0 %424
  %v427 = vmul.f32 %v406, %v425
  %v428 = vpack.c.bf16 %v427, %v427
  %v430 = vrot.slane %v428, 3
  %431 = vrot.lane.b32.xlu0 %v430, 32
  %v432 = vpop.permute.xlu0 %431
  %v434 = vsel %vm123, %v432, 0
  %436 = vmatprep.subr.bf16.mxu0 0
  %437 = vmatpush1.bf16.msra.mxu0 0
  %438 = vmatprep.subr.bf16.mxu0 0
  %439 = vmatpush1.bf16.msra.mxu0 0
  %440 = vmatprep.subr.bf16.mxu0 0
  %441 = vmatpush1.bf16.msra.mxu0 0
  %442 = vmatprep.subr.bf16.mxu0 0
  %443 = vmatpush1.bf16.msra.mxu0 0
  %444 = vmatprep.subr.bf16.mxu0 0
  %445 = vmatpush1.bf16.msra.mxu0 0
  %446 = vmatprep.subr.bf16.mxu0 0
  %447 = vmatpush1.bf16.msra.mxu0 0
  %448 = vmatprep.subr.bf16.mxu0 0
  %449 = vmatpush1.bf16.msra.mxu0 %v120
  %450 = vmatprep.subr.bf16.mxu0 0
  %451 = vmatpush1.bf16.msra.mxu0 %v119
  %452 = vmatprep.subr.bf16.mxu0 0
  %453 = vmatpush2.bf16.msra.mxu0 0
  %454 = vmatprep.subr.bf16.mxu0 0
  %455 = vmatpush2.bf16.msra.mxu0 0
  %456 = vmatprep.subr.bf16.mxu0 0
  %457 = vmatpush2.bf16.msra.mxu0 0
  %458 = vmatprep.subr.bf16.mxu0 0
  %459 = vmatpush2.bf16.msra.mxu0 0
  %460 = vmatprep.subr.bf16.mxu0 0
  %461 = vmatpush2.bf16.msra.mxu0 0
  %462 = vmatprep.subr.bf16.mxu0 0
  %463 = vmatpush2.bf16.msra.mxu0 0
  %464 = vmatprep.subr.bf16.mxu0 0
  %465 = vmatpush2.bf16.msra.mxu0 0
  %466 = vmatprep.subr.bf16.mxu0 0
  %467 = vmatpush2.bf16.msra.mxu0 0
  %468 = vmatprep.mubr.bf16.mxu0 0
  %469 = vmatmul.mubr.bf16.gmra.mxu0 %v434
  %v470 = vpop.f32.mrf.mxu0
  %v471 = vadd.f32 0.0, %v470
  %v472 = vpop.f32.mrf.mxu0
  %v473 = vpop.f32.mrf.mxu0
  %v474 = vpop.f32.mrf.mxu0
  %475 = vdwg.mxu0
  %v476 = vadd.f32 %v108, %v471
  %v477 = vxor.u32 %v476, 2147483648
  %v478 = vmul.f32 %v477, 1.442695
  %v479 = vpow.pop %v478
  %v480 = vadd.f32 %v479, 1.0
  %v481 = vrcp.pop %v480
  %v482 = vmul.f32 1.0, %v481
  %v483 = vtanh.pop %v476
  %v485 = vrot.slane %v421, 6
  %v487 = vmul.f32 %v482, %v485
  %489 = vrot.lane.b32.xlu0 %v483, 64
  %v490 = vpop.permute.xlu0 %489
  %v492 = vmul.f32 %v482, %v490
  %494 = vrot.lane.b32.xlu0 %v492, 32
  %v495 = vpop.permute.xlu0 %494
  %v497 = vadd.f32 %v487, %v495
  %v498 = vtanh.pop %v497
  %500 = vrot.lane.b32.xlu0 %v498, 64
  %v501 = vpop.permute.xlu0 %500
  %v503 = vmul.f32 %v482, %v501
  %v504 = vpack.c.bf16 %v503, %v503
  %506 = vrot.lane.b32.xlu0 %v504, 32
  %v507 = vpop.permute.xlu0 %506
  %v509 = vsel %vm123, %v507, 0
  %511 = vmatprep.subr.bf16.mxu0 0
  %512 = vmatpush1.bf16.msra.mxu0 0
  %513 = vmatprep.subr.bf16.mxu0 0
  %514 = vmatpush1.bf16.msra.mxu0 0
  %515 = vmatprep.subr.bf16.mxu0 0
  %516 = vmatpush1.bf16.msra.mxu0 0
  %517 = vmatprep.subr.bf16.mxu0 0
  %518 = vmatpush1.bf16.msra.mxu0 0
  %519 = vmatprep.subr.bf16.mxu0 0
  %520 = vmatpush1.bf16.msra.mxu0 0
  %521 = vmatprep.subr.bf16.mxu0 0
  %522 = vmatpush1.bf16.msra.mxu0 0
  %523 = vmatprep.subr.bf16.mxu0 0
  %524 = vmatpush1.bf16.msra.mxu0 %v120
  %525 = vmatprep.subr.bf16.mxu0 0
  %526 = vmatpush1.bf16.msra.mxu0 %v119
  %527 = vmatprep.subr.bf16.mxu0 0
  %528 = vmatpush2.bf16.msra.mxu0 0
  %529 = vmatprep.subr.bf16.mxu0 0
  %530 = vmatpush2.bf16.msra.mxu0 0
  %531 = vmatprep.subr.bf16.mxu0 0
  %532 = vmatpush2.bf16.msra.mxu0 0
  %533 = vmatprep.subr.bf16.mxu0 0
  %534 = vmatpush2.bf16.msra.mxu0 0
  %535 = vmatprep.subr.bf16.mxu0 0
  %536 = vmatpush2.bf16.msra.mxu0 0
  %537 = vmatprep.subr.bf16.mxu0 0
  %538 = vmatpush2.bf16.msra.mxu0 0
  %539 = vmatprep.subr.bf16.mxu0 0
  %540 = vmatpush2.bf16.msra.mxu0 0
  %541 = vmatprep.subr.bf16.mxu0 0
  %542 = vmatpush2.bf16.msra.mxu0 0
  %543 = vmatprep.mubr.bf16.mxu0 0
  %544 = vmatmul.mubr.bf16.gmra.mxu0 %v509
  %v545 = vpop.f32.mrf.mxu0
  %v546 = vadd.f32 0.0, %v545
  %v547 = vpop.f32.mrf.mxu0
  %v548 = vpop.f32.mrf.mxu0
  %v549 = vpop.f32.mrf.mxu0
  %550 = vdwg.mxu0
  %v552 = vrot.slane %v546, 6
  %v554 = vadd.f32 %v108, %v552
  %v555 = vxor.u32 %v554, 2147483648
  %v556 = vmul.f32 %v555, 1.442695
  %v557 = vpow.pop %v556
  %v558 = vadd.f32 %v557, 1.0
  %v559 = vrcp.pop %v558
  %v560 = vmul.f32 1.0, %v559
  %v561 = vtanh.pop %v554
  %v563 = vrot.slane %v497, 6
  %v565 = vmul.f32 %v560, %v563
  %567 = vrot.lane.b32.xlu0 %v561, 64
  %v568 = vpop.permute.xlu0 %567
  %v570 = vmul.f32 %v560, %v568
  %572 = vrot.lane.b32.xlu0 %v570, 32
  %v573 = vpop.permute.xlu0 %572
  %v575 = vadd.f32 %v565, %v573
  %v576 = vtanh.pop %v575
  %578 = vrot.lane.b32.xlu0 %v576, 64
  %v579 = vpop.permute.xlu0 %578
  %v581 = vmul.f32 %v560, %v579
  %v582 = vpack.c.bf16 %v581, %v581
  %v584 = vrot.slane %v582, 1
  %585 = vrot.lane.b32.xlu0 %v584, 32
  %v586 = vpop.permute.xlu0 %585
  %v588 = vsel %vm123, %v586, 0
  %590 = vmatprep.subr.bf16.mxu0 0
  %591 = vmatpush1.bf16.msra.mxu0 0
  %592 = vmatprep.subr.bf16.mxu0 0
  %593 = vmatpush1.bf16.msra.mxu0 0
  %594 = vmatprep.subr.bf16.mxu0 0
  %595 = vmatpush1.bf16.msra.mxu0 0
  %596 = vmatprep.subr.bf16.mxu0 0
  %597 = vmatpush1.bf16.msra.mxu0 0
  %598 = vmatprep.subr.bf16.mxu0 0
  %599 = vmatpush1.bf16.msra.mxu0 0
  %600 = vmatprep.subr.bf16.mxu0 0
  %601 = vmatpush1.bf16.msra.mxu0 0
  %602 = vmatprep.subr.bf16.mxu0 0
  %603 = vmatpush1.bf16.msra.mxu0 %v120
  %604 = vmatprep.subr.bf16.mxu0 0
  %605 = vmatpush1.bf16.msra.mxu0 %v119
  %606 = vmatprep.subr.bf16.mxu0 0
  %607 = vmatpush2.bf16.msra.mxu0 0
  %608 = vmatprep.subr.bf16.mxu0 0
  %609 = vmatpush2.bf16.msra.mxu0 0
  %610 = vmatprep.subr.bf16.mxu0 0
  %611 = vmatpush2.bf16.msra.mxu0 0
  %612 = vmatprep.subr.bf16.mxu0 0
  %613 = vmatpush2.bf16.msra.mxu0 0
  %614 = vmatprep.subr.bf16.mxu0 0
  %615 = vmatpush2.bf16.msra.mxu0 0
  %616 = vmatprep.subr.bf16.mxu0 0
  %617 = vmatpush2.bf16.msra.mxu0 0
  %618 = vmatprep.subr.bf16.mxu0 0
  %619 = vmatpush2.bf16.msra.mxu0 0
  %620 = vmatprep.subr.bf16.mxu0 0
  %621 = vmatpush2.bf16.msra.mxu0 0
  %622 = vmatprep.mubr.bf16.mxu0 0
  %623 = vmatmul.mubr.bf16.gmra.mxu0 %v588
  %v624 = vpop.f32.mrf.mxu0
  %v625 = vadd.f32 0.0, %v624
  %v626 = vpop.f32.mrf.mxu0
  %v627 = vpop.f32.mrf.mxu0
  %v628 = vpop.f32.mrf.mxu0
  %629 = vdwg.mxu0
  %v631 = vrot.slane %v625, 4
  %v633 = vadd.f32 %v108, %v631
  %v634 = vxor.u32 %v633, 2147483648
  %v635 = vmul.f32 %v634, 1.442695
  %v636 = vpow.pop %v635
  %v637 = vadd.f32 %v636, 1.0
  %v638 = vrcp.pop %v637
  %v639 = vmul.f32 1.0, %v638
  %v640 = vtanh.pop %v633
  %v642 = vrot.slane %v575, 6
  %v644 = vmul.f32 %v639, %v642
  %646 = vrot.lane.b32.xlu0 %v640, 64
  %v647 = vpop.permute.xlu0 %646
  %v649 = vmul.f32 %v639, %v647
  %651 = vrot.lane.b32.xlu0 %v649, 32
  %v652 = vpop.permute.xlu0 %651
  %v654 = vadd.f32 %v644, %v652
  %v655 = vtanh.pop %v654
  %657 = vrot.lane.b32.xlu0 %v655, 64
  %v658 = vpop.permute.xlu0 %657
  %v660 = vmul.f32 %v639, %v658
  %v661 = vpack.c.bf16 %v660, %v660
  %v663 = vrot.slane %v661, 2
  %664 = vrot.lane.b32.xlu0 %v663, 32
  %v665 = vpop.permute.xlu0 %664
  %v667 = vsel %vm123, %v665, 0
  %669 = vmatprep.subr.bf16.mxu0 0
  %670 = vmatpush1.bf16.msra.mxu0 0
  %671 = vmatprep.subr.bf16.mxu0 0
  %672 = vmatpush1.bf16.msra.mxu0 0
  %673 = vmatprep.subr.bf16.mxu0 0
  %674 = vmatpush1.bf16.msra.mxu0 0
  %675 = vmatprep.subr.bf16.mxu0 0
  %676 = vmatpush1.bf16.msra.mxu0 0
  %677 = vmatprep.subr.bf16.mxu0 0
  %678 = vmatpush1.bf16.msra.mxu0 0
  %679 = vmatprep.subr.bf16.mxu0 0
  %680 = vmatpush1.bf16.msra.mxu0 0
  %681 = vmatprep.subr.bf16.mxu0 0
  %682 = vmatpush1.bf16.msra.mxu0 %v120
  %683 = vmatprep.subr.bf16.mxu0 0
  %684 = vmatpush1.bf16.msra.mxu0 %v119
  %685 = vmatprep.subr.bf16.mxu0 0
  %686 = vmatpush2.bf16.msra.mxu0 0
  %687 = vmatprep.subr.bf16.mxu0 0
  %688 = vmatpush2.bf16.msra.mxu0 0
  %689 = vmatprep.subr.bf16.mxu0 0
  %690 = vmatpush2.bf16.msra.mxu0 0
  %691 = vmatprep.subr.bf16.mxu0 0
  %692 = vmatpush2.bf16.msra.mxu0 0
  %693 = vmatprep.subr.bf16.mxu0 0
  %694 = vmatpush2.bf16.msra.mxu0 0
  %695 = vmatprep.subr.bf16.mxu0 0
  %696 = vmatpush2.bf16.msra.mxu0 0
  %697 = vmatprep.subr.bf16.mxu0 0
  %698 = vmatpush2.bf16.msra.mxu0 0
  %699 = vmatprep.subr.bf16.mxu0 0
  %700 = vmatpush2.bf16.msra.mxu0 0
  %701 = vmatprep.mubr.bf16.mxu0 0
  %702 = vmatmul.mubr.bf16.gmra.mxu0 %v667
  %v703 = vpop.f32.mrf.mxu0
  %v704 = vadd.f32 0.0, %v703
  %v705 = vpop.f32.mrf.mxu0
  %v706 = vpop.f32.mrf.mxu0
  %v707 = vpop.f32.mrf.mxu0
  %708 = vdwg.mxu0
  %v710 = vrot.slane %v704, 2
  %v712 = vadd.f32 %v108, %v710
  %v713 = vxor.u32 %v712, 2147483648
  %v714 = vmul.f32 %v713, 1.442695
  %v715 = vpow.pop %v714
  %v716 = vadd.f32 %v715, 1.0
  %v717 = vrcp.pop %v716
  %v718 = vmul.f32 1.0, %v717
  %v719 = vtanh.pop %v712
  %v721 = vrot.slane %v654, 6
  %v723 = vmul.f32 %v718, %v721
  %725 = vrot.lane.b32.xlu0 %v719, 64
  %v726 = vpop.permute.xlu0 %725
  %v728 = vmul.f32 %v718, %v726
  %730 = vrot.lane.b32.xlu0 %v728, 32
  %v731 = vpop.permute.xlu0 %730
  %v733 = vadd.f32 %v723, %v731
  %v734 = vtanh.pop %v733
  %736 = vrot.lane.b32.xlu0 %v734, 64
  %v737 = vpop.permute.xlu0 %736
  %v739 = vmul.f32 %v718, %v737
  %vm740 = vcmask 1041408
  %v741 = vsel %vm740, %v191, %v269
  %v742 = vsel %vm66, %v741, %v348
  %vm743 = vcmask 1045504
  %v744 = vsel %vm743, %v742, %v427
  %v745 = vsel %vm740, %v503, %v581
  %v746 = vsel %vm66, %v745, %v660
  %v747 = vsel %vm743, %v746, %v739
  %v748 = vld [vmem:[%s4] sm:$0xf]
  %v749 = vld [vmem:[%s4 + $0x4] sm:$0xf]
  %v750 = vld [vmem:[%s4 + $0x8] sm:$0xf]
  %v751 = vld [vmem:[%s4 + $0xc] sm:$0xf]
  %v752 = vld [vmem:[%s5] sm:$0xf]
  %v753 = vld [vmem:[%s5 + $0x4] sm:$0xf]
  %v754 = vld [vmem:[%s5 + $0x8] sm:$0xf]
  %v755 = vld [vmem:[%s5 + $0xc] sm:$0xf]
  %v756 = vld [vmem:[%s6] sm:$0x1]
  %v757 = vpack.c.bf16 %v747, %v744
  %v759 = vlaneseq
  %v760 = vshrl.u32 %v759, 7
  %v761 = vsub.s32 0, %v760
  %v762 = vrot.slane %v756, %v761
  %765 = vrot.lane.b32.xlu0 %v757, 32
  %v766 = vpop.permute.xlu0 %765
  %v771 = vunpack.c.l.b16 %v748
  %v772 = vunpack.c.l.b16 %v749
  %v773 = vunpack.c.l.b16 %v750
  %v774 = vunpack.c.l.b16 %v751
  %v775 = vpack.c.b16 %v772, %v771
  %v776 = vpack.c.b16 %v774, %v773
  %v780 = vsel %vm123, %v766, 0
  %782 = vmatprep.subr.bf16.mxu0 0
  %783 = vmatpush1.bf16.msra.mxu0 0
  %784 = vmatprep.subr.bf16.mxu0 0
  %785 = vmatpush1.bf16.msra.mxu0 0
  %786 = vmatprep.subr.bf16.mxu0 0
  %787 = vmatpush1.bf16.msra.mxu0 0
  %788 = vmatprep.subr.bf16.mxu0 0
  %789 = vmatpush1.bf16.msra.mxu0 0
  %790 = vmatprep.subr.bf16.mxu0 0
  %791 = vmatpush1.bf16.msra.mxu0 0
  %792 = vmatprep.subr.bf16.mxu0 0
  %793 = vmatpush1.bf16.msra.mxu0 0
  %794 = vmatprep.subr.bf16.mxu0 0
  %795 = vmatpush1.bf16.msra.mxu0 %v776
  %796 = vmatprep.subr.bf16.mxu0 0
  %797 = vmatpush1.bf16.msra.mxu0 %v775
  %798 = vmatprep.subr.bf16.mxu0 0
  %799 = vmatpush2.bf16.msra.mxu0 0
  %800 = vmatprep.subr.bf16.mxu0 0
  %801 = vmatpush2.bf16.msra.mxu0 0
  %802 = vmatprep.subr.bf16.mxu0 0
  %803 = vmatpush2.bf16.msra.mxu0 0
  %804 = vmatprep.subr.bf16.mxu0 0
  %805 = vmatpush2.bf16.msra.mxu0 0
  %806 = vmatprep.subr.bf16.mxu0 0
  %807 = vmatpush2.bf16.msra.mxu0 0
  %808 = vmatprep.subr.bf16.mxu0 0
  %809 = vmatpush2.bf16.msra.mxu0 0
  %810 = vmatprep.subr.bf16.mxu0 0
  %811 = vmatpush2.bf16.msra.mxu0 0
  %812 = vmatprep.subr.bf16.mxu0 0
  %813 = vmatpush2.bf16.msra.mxu0 0
  %814 = vmatprep.mubr.bf16.mxu0 0
  %815 = vmatmul.mubr.bf16.gmra.mxu0 %v780
  %v816 = vpop.f32.mrf.mxu0
  %v817 = vadd.f32 %v762, %v816
  %v818 = vpop.f32.mrf.mxu0
  %v819 = vpop.f32.mrf.mxu0
  %v820 = vadd.f32 %v762, %v819
  %v821 = vpop.f32.mrf.mxu0
  %822 = vdwg.mxu0
  %v827 = vunpack.c.l.b16 %v752
  %v828 = vunpack.c.l.b16 %v753
  %v829 = vunpack.c.l.b16 %v754
  %v830 = vunpack.c.l.b16 %v755
  %v831 = vpack.c.b16 %v828, %v827
  %v832 = vpack.c.b16 %v830, %v829
  %835 = vmatprep.subr.bf16.mxu0 0
  %836 = vmatpush1.bf16.msra.mxu0 0
  %837 = vmatprep.subr.bf16.mxu0 0
  %838 = vmatpush1.bf16.msra.mxu0 0
  %839 = vmatprep.subr.bf16.mxu0 0
  %840 = vmatpush1.bf16.msra.mxu0 0
  %841 = vmatprep.subr.bf16.mxu0 0
  %842 = vmatpush1.bf16.msra.mxu0 0
  %843 = vmatprep.subr.bf16.mxu0 0
  %844 = vmatpush1.bf16.msra.mxu0 0
  %845 = vmatprep.subr.bf16.mxu0 0
  %846 = vmatpush1.bf16.msra.mxu0 0
  %847 = vmatprep.subr.bf16.mxu0 0
  %848 = vmatpush1.bf16.msra.mxu0 %v832
  %849 = vmatprep.subr.bf16.mxu0 0
  %850 = vmatpush1.bf16.msra.mxu0 %v831
  %851 = vmatprep.subr.bf16.mxu0 0
  %852 = vmatpush2.bf16.msra.mxu0 0
  %853 = vmatprep.subr.bf16.mxu0 0
  %854 = vmatpush2.bf16.msra.mxu0 0
  %855 = vmatprep.subr.bf16.mxu0 0
  %856 = vmatpush2.bf16.msra.mxu0 0
  %857 = vmatprep.subr.bf16.mxu0 0
  %858 = vmatpush2.bf16.msra.mxu0 0
  %859 = vmatprep.subr.bf16.mxu0 0
  %860 = vmatpush2.bf16.msra.mxu0 0
  %861 = vmatprep.subr.bf16.mxu0 0
  %862 = vmatpush2.bf16.msra.mxu0 0
  %863 = vmatprep.subr.bf16.mxu0 0
  %864 = vmatpush2.bf16.msra.mxu0 0
  %865 = vmatprep.subr.bf16.mxu0 0
  %866 = vmatpush2.bf16.msra.mxu0 0
  %867 = vmatprep.mubr.bf16.mxu0 0
  %868 = vmatmul.mubr.bf16.gmra.mxu0 %v125
  %v869 = vpop.f32.mrf.mxu0
  %v870 = vadd.f32 0.0, %v869
  %v871 = vpop.f32.mrf.mxu0
  %v872 = vpop.f32.mrf.mxu0
  %v873 = vpop.f32.mrf.mxu0
  %874 = vdwg.mxu0
  %v875 = vadd.f32 %v817, %v870
  %v876 = vxor.u32 %v875, 2147483648
  %v877 = vmul.f32 %v876, 1.442695
  %v878 = vpow.pop %v877
  %v879 = vadd.f32 %v878, 1.0
  %v880 = vrcp.pop %v879
  %v881 = vmul.f32 1.0, %v880
  %v882 = vtanh.pop %v875
  %v883 = vmul.f32 %v881, 0.0
  %885 = vrot.lane.b32.xlu0 %v882, 64
  %v886 = vpop.permute.xlu0 %885
  %v888 = vmul.f32 %v881, %v886
  %890 = vrot.lane.b32.xlu0 %v888, 32
  %v891 = vpop.permute.xlu0 %890
  %v893 = vadd.f32 %v883, %v891
  %v894 = vtanh.pop %v893
  %896 = vrot.lane.b32.xlu0 %v894, 64
  %v897 = vpop.permute.xlu0 %896
  %v899 = vmul.f32 %v881, %v897
  %v900 = vpack.c.bf16 %v899, %v899
  %902 = vrot.lane.b32.xlu0 %v900, 32
  %v903 = vpop.permute.xlu0 %902
  %v905 = vsel %vm123, %v903, 0
  %907 = vmatprep.subr.bf16.mxu0 0
  %908 = vmatpush1.bf16.msra.mxu0 0
  %909 = vmatprep.subr.bf16.mxu0 0
  %910 = vmatpush1.bf16.msra.mxu0 0
  %911 = vmatprep.subr.bf16.mxu0 0
  %912 = vmatpush1.bf16.msra.mxu0 0
  %913 = vmatprep.subr.bf16.mxu0 0
  %914 = vmatpush1.bf16.msra.mxu0 0
  %915 = vmatprep.subr.bf16.mxu0 0
  %916 = vmatpush1.bf16.msra.mxu0 0
  %917 = vmatprep.subr.bf16.mxu0 0
  %918 = vmatpush1.bf16.msra.mxu0 0
  %919 = vmatprep.subr.bf16.mxu0 0
  %920 = vmatpush1.bf16.msra.mxu0 %v832
  %921 = vmatprep.subr.bf16.mxu0 0
  %922 = vmatpush1.bf16.msra.mxu0 %v831
  %923 = vmatprep.subr.bf16.mxu0 0
  %924 = vmatpush2.bf16.msra.mxu0 0
  %925 = vmatprep.subr.bf16.mxu0 0
  %926 = vmatpush2.bf16.msra.mxu0 0
  %927 = vmatprep.subr.bf16.mxu0 0
  %928 = vmatpush2.bf16.msra.mxu0 0
  %929 = vmatprep.subr.bf16.mxu0 0
  %930 = vmatpush2.bf16.msra.mxu0 0
  %931 = vmatprep.subr.bf16.mxu0 0
  %932 = vmatpush2.bf16.msra.mxu0 0
  %933 = vmatprep.subr.bf16.mxu0 0
  %934 = vmatpush2.bf16.msra.mxu0 0
  %935 = vmatprep.subr.bf16.mxu0 0
  %936 = vmatpush2.bf16.msra.mxu0 0
  %937 = vmatprep.subr.bf16.mxu0 0
  %938 = vmatpush2.bf16.msra.mxu0 0
  %939 = vmatprep.mubr.bf16.mxu0 0
  %940 = vmatmul.mubr.bf16.gmra.mxu0 %v905
  %v941 = vpop.f32.mrf.mxu0
  %v942 = vadd.f32 0.0, %v941
  %v943 = vpop.f32.mrf.mxu0
  %v944 = vpop.f32.mrf.mxu0
  %v945 = vpop.f32.mrf.mxu0
  %946 = vdwg.mxu0
  %v948 = vrot.slane %v942, 6
  %v950 = vadd.f32 %v817, %v948
  %v951 = vxor.u32 %v950, 2147483648
  %v952 = vmul.f32 %v951, 1.442695
  %v953 = vpow.pop %v952
  %v954 = vadd.f32 %v953, 1.0
  %v955 = vrcp.pop %v954
  %v956 = vmul.f32 1.0, %v955
  %v957 = vtanh.pop %v950
  %v959 = vrot.slane %v893, 6
  %v961 = vmul.f32 %v956, %v959
  %963 = vrot.lane.b32.xlu0 %v957, 64
  %v964 = vpop.permute.xlu0 %963
  %v966 = vmul.f32 %v956, %v964
  %968 = vrot.lane.b32.xlu0 %v966, 32
  %v969 = vpop.permute.xlu0 %968
  %v971 = vadd.f32 %v961, %v969
  %v972 = vtanh.pop %v971
  %974 = vrot.lane.b32.xlu0 %v972, 64
  %v975 = vpop.permute.xlu0 %974
  %v977 = vmul.f32 %v956, %v975
  %v978 = vpack.c.bf16 %v977, %v977
  %v980 = vrot.slane %v978, 1
  %981 = vrot.lane.b32.xlu0 %v980, 32
  %v982 = vpop.permute.xlu0 %981
  %v984 = vsel %vm123, %v982, 0
  %986 = vmatprep.subr.bf16.mxu0 0
  %987 = vmatpush1.bf16.msra.mxu0 0
  %988 = vmatprep.subr.bf16.mxu0 0
  %989 = vmatpush1.bf16.msra.mxu0 0
  %990 = vmatprep.subr.bf16.mxu0 0
  %991 = vmatpush1.bf16.msra.mxu0 0
  %992 = vmatprep.subr.bf16.mxu0 0
  %993 = vmatpush1.bf16.msra.mxu0 0
  %994 = vmatprep.subr.bf16.mxu0 0
  %995 = vmatpush1.bf16.msra.mxu0 0
  %996 = vmatprep.subr.bf16.mxu0 0
  %997 = vmatpush1.bf16.msra.mxu0 0
  %998 = vmatprep.subr.bf16.mxu0 0
  %999 = vmatpush1.bf16.msra.mxu0 %v832
  %1000 = vmatprep.subr.bf16.mxu0 0
  %1001 = vmatpush1.bf16.msra.mxu0 %v831
  %1002 = vmatprep.subr.bf16.mxu0 0
  %1003 = vmatpush2.bf16.msra.mxu0 0
  %1004 = vmatprep.subr.bf16.mxu0 0
  %1005 = vmatpush2.bf16.msra.mxu0 0
  %1006 = vmatprep.subr.bf16.mxu0 0
  %1007 = vmatpush2.bf16.msra.mxu0 0
  %1008 = vmatprep.subr.bf16.mxu0 0
  %1009 = vmatpush2.bf16.msra.mxu0 0
  %1010 = vmatprep.subr.bf16.mxu0 0
  %1011 = vmatpush2.bf16.msra.mxu0 0
  %1012 = vmatprep.subr.bf16.mxu0 0
  %1013 = vmatpush2.bf16.msra.mxu0 0
  %1014 = vmatprep.subr.bf16.mxu0 0
  %1015 = vmatpush2.bf16.msra.mxu0 0
  %1016 = vmatprep.subr.bf16.mxu0 0
  %1017 = vmatpush2.bf16.msra.mxu0 0
  %1018 = vmatprep.mubr.bf16.mxu0 0
  %1019 = vmatmul.mubr.bf16.gmra.mxu0 %v984
  %v1020 = vpop.f32.mrf.mxu0
  %v1021 = vadd.f32 0.0, %v1020
  %v1022 = vpop.f32.mrf.mxu0
  %v1023 = vpop.f32.mrf.mxu0
  %v1024 = vpop.f32.mrf.mxu0
  %1025 = vdwg.mxu0
  %v1027 = vrot.slane %v1021, 4
  %v1029 = vadd.f32 %v817, %v1027
  %v1030 = vxor.u32 %v1029, 2147483648
  %v1031 = vmul.f32 %v1030, 1.442695
  %v1032 = vpow.pop %v1031
  %v1033 = vadd.f32 %v1032, 1.0
  %v1034 = vrcp.pop %v1033
  %v1035 = vmul.f32 1.0, %v1034
  %v1036 = vtanh.pop %v1029
  %v1038 = vrot.slane %v971, 6
  %v1040 = vmul.f32 %v1035, %v1038
  %1042 = vrot.lane.b32.xlu0 %v1036, 64
  %v1043 = vpop.permute.xlu0 %1042
  %v1045 = vmul.f32 %v1035, %v1043
  %1047 = vrot.lane.b32.xlu0 %v1045, 32
  %v1048 = vpop.permute.xlu0 %1047
  %v1050 = vadd.f32 %v1040, %v1048
  %v1051 = vtanh.pop %v1050
  %1053 = vrot.lane.b32.xlu0 %v1051, 64
  %v1054 = vpop.permute.xlu0 %1053
  %v1056 = vmul.f32 %v1035, %v1054
  %v1057 = vpack.c.bf16 %v1056, %v1056
  %v1059 = vrot.slane %v1057, 2
  %1060 = vrot.lane.b32.xlu0 %v1059, 32
  %v1061 = vpop.permute.xlu0 %1060
  %v1063 = vsel %vm123, %v1061, 0
  %1065 = vmatprep.subr.bf16.mxu0 0
  %1066 = vmatpush1.bf16.msra.mxu0 0
  %1067 = vmatprep.subr.bf16.mxu0 0
  %1068 = vmatpush1.bf16.msra.mxu0 0
  %1069 = vmatprep.subr.bf16.mxu0 0
  %1070 = vmatpush1.bf16.msra.mxu0 0
  %1071 = vmatprep.subr.bf16.mxu0 0
  %1072 = vmatpush1.bf16.msra.mxu0 0
  %1073 = vmatprep.subr.bf16.mxu0 0
  %1074 = vmatpush1.bf16.msra.mxu0 0
  %1075 = vmatprep.subr.bf16.mxu0 0
  %1076 = vmatpush1.bf16.msra.mxu0 0
  %1077 = vmatprep.subr.bf16.mxu0 0
  %1078 = vmatpush1.bf16.msra.mxu0 %v832
  %1079 = vmatprep.subr.bf16.mxu0 0
  %1080 = vmatpush1.bf16.msra.mxu0 %v831
  %1081 = vmatprep.subr.bf16.mxu0 0
  %1082 = vmatpush2.bf16.msra.mxu0 0
  %1083 = vmatprep.subr.bf16.mxu0 0
  %1084 = vmatpush2.bf16.msra.mxu0 0
  %1085 = vmatprep.subr.bf16.mxu0 0
  %1086 = vmatpush2.bf16.msra.mxu0 0
  %1087 = vmatprep.subr.bf16.mxu0 0
  %1088 = vmatpush2.bf16.msra.mxu0 0
  %1089 = vmatprep.subr.bf16.mxu0 0
  %1090 = vmatpush2.bf16.msra.mxu0 0
  %1091 = vmatprep.subr.bf16.mxu0 0
  %1092 = vmatpush2.bf16.msra.mxu0 0
  %1093 = vmatprep.subr.bf16.mxu0 0
  %1094 = vmatpush2.bf16.msra.mxu0 0
  %1095 = vmatprep.subr.bf16.mxu0 0
  %1096 = vmatpush2.bf16.msra.mxu0 0
  %1097 = vmatprep.mubr.bf16.mxu0 0
  %1098 = vmatmul.mubr.bf16.gmra.mxu0 %v1063
  %v1099 = vpop.f32.mrf.mxu0
  %v1100 = vadd.f32 0.0, %v1099
  %v1101 = vpop.f32.mrf.mxu0
  %v1102 = vpop.f32.mrf.mxu0
  %v1103 = vpop.f32.mrf.mxu0
  %1104 = vdwg.mxu0
  %v1106 = vrot.slane %v1100, 2
  %v1108 = vadd.f32 %v817, %v1106
  %v1109 = vxor.u32 %v1108, 2147483648
  %v1110 = vmul.f32 %v1109, 1.442695
  %v1111 = vpow.pop %v1110
  %v1112 = vadd.f32 %v1111, 1.0
  %v1113 = vrcp.pop %v1112
  %v1114 = vmul.f32 1.0, %v1113
  %v1115 = vtanh.pop %v1108
  %v1117 = vrot.slane %v1050, 6
  %v1119 = vmul.f32 %v1114, %v1117
  %1121 = vrot.lane.b32.xlu0 %v1115, 64
  %v1122 = vpop.permute.xlu0 %1121
  %v1124 = vmul.f32 %v1114, %v1122
  %1126 = vrot.lane.b32.xlu0 %v1124, 32
  %v1127 = vpop.permute.xlu0 %1126
  %v1129 = vadd.f32 %v1119, %v1127
  %v1130 = vtanh.pop %v1129
  %1132 = vrot.lane.b32.xlu0 %v1130, 64
  %v1133 = vpop.permute.xlu0 %1132
  %v1135 = vmul.f32 %v1114, %v1133
  %v1136 = vpack.c.bf16 %v1135, %v1135
  %v1138 = vrot.slane %v1136, 3
  %1139 = vrot.lane.b32.xlu0 %v1138, 32
  %v1140 = vpop.permute.xlu0 %1139
  %v1142 = vsel %vm123, %v1140, 0
  %1144 = vmatprep.subr.bf16.mxu0 0
  %1145 = vmatpush1.bf16.msra.mxu0 0
  %1146 = vmatprep.subr.bf16.mxu0 0
  %1147 = vmatpush1.bf16.msra.mxu0 0
  %1148 = vmatprep.subr.bf16.mxu0 0
  %1149 = vmatpush1.bf16.msra.mxu0 0
  %1150 = vmatprep.subr.bf16.mxu0 0
  %1151 = vmatpush1.bf16.msra.mxu0 0
  %1152 = vmatprep.subr.bf16.mxu0 0
  %1153 = vmatpush1.bf16.msra.mxu0 0
  %1154 = vmatprep.subr.bf16.mxu0 0
  %1155 = vmatpush1.bf16.msra.mxu0 0
  %1156 = vmatprep.subr.bf16.mxu0 0
  %1157 = vmatpush1.bf16.msra.mxu0 %v832
  %1158 = vmatprep.subr.bf16.mxu0 0
  %1159 = vmatpush1.bf16.msra.mxu0 %v831
  %1160 = vmatprep.subr.bf16.mxu0 0
  %1161 = vmatpush2.bf16.msra.mxu0 0
  %1162 = vmatprep.subr.bf16.mxu0 0
  %1163 = vmatpush2.bf16.msra.mxu0 0
  %1164 = vmatprep.subr.bf16.mxu0 0
  %1165 = vmatpush2.bf16.msra.mxu0 0
  %1166 = vmatprep.subr.bf16.mxu0 0
  %1167 = vmatpush2.bf16.msra.mxu0 0
  %1168 = vmatprep.subr.bf16.mxu0 0
  %1169 = vmatpush2.bf16.msra.mxu0 0
  %1170 = vmatprep.subr.bf16.mxu0 0
  %1171 = vmatpush2.bf16.msra.mxu0 0
  %1172 = vmatprep.subr.bf16.mxu0 0
  %1173 = vmatpush2.bf16.msra.mxu0 0
  %1174 = vmatprep.subr.bf16.mxu0 0
  %1175 = vmatpush2.bf16.msra.mxu0 0
  %1176 = vmatprep.mubr.bf16.mxu0 0
  %1177 = vmatmul.mubr.bf16.gmra.mxu0 %v1142
  %v1178 = vpop.f32.mrf.mxu0
  %v1179 = vadd.f32 0.0, %v1178
  %v1180 = vpop.f32.mrf.mxu0
  %v1181 = vpop.f32.mrf.mxu0
  %v1182 = vpop.f32.mrf.mxu0
  %1183 = vdwg.mxu0
  %v1184 = vadd.f32 %v820, %v1179
  %v1185 = vxor.u32 %v1184, 2147483648
  %v1186 = vmul.f32 %v1185, 1.442695
  %v1187 = vpow.pop %v1186
  %v1188 = vadd.f32 %v1187, 1.0
  %v1189 = vrcp.pop %v1188
  %v1190 = vmul.f32 1.0, %v1189
  %v1191 = vtanh.pop %v1184
  %v1193 = vrot.slane %v1129, 6
  %v1195 = vmul.f32 %v1190, %v1193
  %1197 = vrot.lane.b32.xlu0 %v1191, 64
  %v1198 = vpop.permute.xlu0 %1197
  %v1200 = vmul.f32 %v1190, %v1198
  %1202 = vrot.lane.b32.xlu0 %v1200, 32
  %v1203 = vpop.permute.xlu0 %1202
  %v1205 = vadd.f32 %v1195, %v1203
  %v1206 = vtanh.pop %v1205
  %1208 = vrot.lane.b32.xlu0 %v1206, 64
  %v1209 = vpop.permute.xlu0 %1208
  %v1211 = vmul.f32 %v1190, %v1209
  %v1212 = vpack.c.bf16 %v1211, %v1211
  %1214 = vrot.lane.b32.xlu0 %v1212, 32
  %v1215 = vpop.permute.xlu0 %1214
  %v1217 = vsel %vm123, %v1215, 0
  %1219 = vmatprep.subr.bf16.mxu0 0
  %1220 = vmatpush1.bf16.msra.mxu0 0
  %1221 = vmatprep.subr.bf16.mxu0 0
  %1222 = vmatpush1.bf16.msra.mxu0 0
  %1223 = vmatprep.subr.bf16.mxu0 0
  %1224 = vmatpush1.bf16.msra.mxu0 0
  %1225 = vmatprep.subr.bf16.mxu0 0
  %1226 = vmatpush1.bf16.msra.mxu0 0
  %1227 = vmatprep.subr.bf16.mxu0 0
  %1228 = vmatpush1.bf16.msra.mxu0 0
  %1229 = vmatprep.subr.bf16.mxu0 0
  %1230 = vmatpush1.bf16.msra.mxu0 0
  %1231 = vmatprep.subr.bf16.mxu0 0
  %1232 = vmatpush1.bf16.msra.mxu0 %v832
  %1233 = vmatprep.subr.bf16.mxu0 0
  %1234 = vmatpush1.bf16.msra.mxu0 %v831
  %1235 = vmatprep.subr.bf16.mxu0 0
  %1236 = vmatpush2.bf16.msra.mxu0 0
  %1237 = vmatprep.subr.bf16.mxu0 0
  %1238 = vmatpush2.bf16.msra.mxu0 0
  %1239 = vmatprep.subr.bf16.mxu0 0
  %1240 = vmatpush2.bf16.msra.mxu0 0
  %1241 = vmatprep.subr.bf16.mxu0 0
  %1242 = vmatpush2.bf16.msra.mxu0 0
  %1243 = vmatprep.subr.bf16.mxu0 0
  %1244 = vmatpush2.bf16.msra.mxu0 0
  %1245 = vmatprep.subr.bf16.mxu0 0
  %1246 = vmatpush2.bf16.msra.mxu0 0
  %1247 = vmatprep.subr.bf16.mxu0 0
  %1248 = vmatpush2.bf16.msra.mxu0 0
  %1249 = vmatprep.subr.bf16.mxu0 0
  %1250 = vmatpush2.bf16.msra.mxu0 0
  %1251 = vmatprep.mubr.bf16.mxu0 0
  %1252 = vmatmul.mubr.bf16.gmra.mxu0 %v1217
  %v1253 = vpop.f32.mrf.mxu0
  %v1254 = vadd.f32 0.0, %v1253
  %v1255 = vpop.f32.mrf.mxu0
  %v1256 = vpop.f32.mrf.mxu0
  %v1257 = vpop.f32.mrf.mxu0
  %1258 = vdwg.mxu0
  %v1260 = vrot.slane %v1254, 6
  %v1262 = vadd.f32 %v820, %v1260
  %v1263 = vxor.u32 %v1262, 2147483648
  %v1264 = vmul.f32 %v1263, 1.442695
  %v1265 = vpow.pop %v1264
  %v1266 = vadd.f32 %v1265, 1.0
  %v1267 = vrcp.pop %v1266
  %v1268 = vmul.f32 1.0, %v1267
  %v1269 = vtanh.pop %v1262
  %v1271 = vrot.slane %v1205, 6
  %v1273 = vmul.f32 %v1268, %v1271
  %1275 = vrot.lane.b32.xlu0 %v1269, 64
  %v1276 = vpop.permute.xlu0 %1275
  %v1278 = vmul.f32 %v1268, %v1276
  %1280 = vrot.lane.b32.xlu0 %v1278, 32
  %v1281 = vpop.permute.xlu0 %1280
  %v1283 = vadd.f32 %v1273, %v1281
  %v1284 = vtanh.pop %v1283
  %1286 = vrot.lane.b32.xlu0 %v1284, 64
  %v1287 = vpop.permute.xlu0 %1286
  %v1289 = vmul.f32 %v1268, %v1287
  %v1290 = vpack.c.bf16 %v1289, %v1289
  %v1292 = vrot.slane %v1290, 1
  %1293 = vrot.lane.b32.xlu0 %v1292, 32
  %v1294 = vpop.permute.xlu0 %1293
  %v1296 = vsel %vm123, %v1294, 0
  %1298 = vmatprep.subr.bf16.mxu0 0
  %1299 = vmatpush1.bf16.msra.mxu0 0
  %1300 = vmatprep.subr.bf16.mxu0 0
  %1301 = vmatpush1.bf16.msra.mxu0 0
  %1302 = vmatprep.subr.bf16.mxu0 0
  %1303 = vmatpush1.bf16.msra.mxu0 0
  %1304 = vmatprep.subr.bf16.mxu0 0
  %1305 = vmatpush1.bf16.msra.mxu0 0
  %1306 = vmatprep.subr.bf16.mxu0 0
  %1307 = vmatpush1.bf16.msra.mxu0 0
  %1308 = vmatprep.subr.bf16.mxu0 0
  %1309 = vmatpush1.bf16.msra.mxu0 0
  %1310 = vmatprep.subr.bf16.mxu0 0
  %1311 = vmatpush1.bf16.msra.mxu0 %v832
  %1312 = vmatprep.subr.bf16.mxu0 0
  %1313 = vmatpush1.bf16.msra.mxu0 %v831
  %1314 = vmatprep.subr.bf16.mxu0 0
  %1315 = vmatpush2.bf16.msra.mxu0 0
  %1316 = vmatprep.subr.bf16.mxu0 0
  %1317 = vmatpush2.bf16.msra.mxu0 0
  %1318 = vmatprep.subr.bf16.mxu0 0
  %1319 = vmatpush2.bf16.msra.mxu0 0
  %1320 = vmatprep.subr.bf16.mxu0 0
  %1321 = vmatpush2.bf16.msra.mxu0 0
  %1322 = vmatprep.subr.bf16.mxu0 0
  %1323 = vmatpush2.bf16.msra.mxu0 0
  %1324 = vmatprep.subr.bf16.mxu0 0
  %1325 = vmatpush2.bf16.msra.mxu0 0
  %1326 = vmatprep.subr.bf16.mxu0 0
  %1327 = vmatpush2.bf16.msra.mxu0 0
  %1328 = vmatprep.subr.bf16.mxu0 0
  %1329 = vmatpush2.bf16.msra.mxu0 0
  %1330 = vmatprep.mubr.bf16.mxu0 0
  %1331 = vmatmul.mubr.bf16.gmra.mxu0 %v1296
  %v1332 = vpop.f32.mrf.mxu0
  %v1333 = vadd.f32 0.0, %v1332
  %v1334 = vpop.f32.mrf.mxu0
  %v1335 = vpop.f32.mrf.mxu0
  %v1336 = vpop.f32.mrf.mxu0
  %1337 = vdwg.mxu0
  %v1339 = vrot.slane %v1333, 4
  %v1341 = vadd.f32 %v820, %v1339
  %v1342 = vxor.u32 %v1341, 2147483648
  %v1343 = vmul.f32 %v1342, 1.442695
  %v1344 = vpow.pop %v1343
  %v1345 = vadd.f32 %v1344, 1.0
  %v1346 = vrcp.pop %v1345
  %v1347 = vmul.f32 1.0, %v1346
  %v1348 = vtanh.pop %v1341
  %v1350 = vrot.slane %v1283, 6
  %v1352 = vmul.f32 %v1347, %v1350
  %1354 = vrot.lane.b32.xlu0 %v1348, 64
  %v1355 = vpop.permute.xlu0 %1354
  %v1357 = vmul.f32 %v1347, %v1355
  %1359 = vrot.lane.b32.xlu0 %v1357, 32
  %v1360 = vpop.permute.xlu0 %1359
  %v1362 = vadd.f32 %v1352, %v1360
  %v1363 = vtanh.pop %v1362
  %1365 = vrot.lane.b32.xlu0 %v1363, 64
  %v1366 = vpop.permute.xlu0 %1365
  %v1368 = vmul.f32 %v1347, %v1366
  %v1369 = vpack.c.bf16 %v1368, %v1368
  %v1371 = vrot.slane %v1369, 2
  %1372 = vrot.lane.b32.xlu0 %v1371, 32
  %v1373 = vpop.permute.xlu0 %1372
  %v1375 = vsel %vm123, %v1373, 0
  %1377 = vmatprep.subr.bf16.mxu0 0
  %1378 = vmatpush1.bf16.msra.mxu0 0
  %1379 = vmatprep.subr.bf16.mxu0 0
  %1380 = vmatpush1.bf16.msra.mxu0 0
  %1381 = vmatprep.subr.bf16.mxu0 0
  %1382 = vmatpush1.bf16.msra.mxu0 0
  %1383 = vmatprep.subr.bf16.mxu0 0
  %1384 = vmatpush1.bf16.msra.mxu0 0
  %1385 = vmatprep.subr.bf16.mxu0 0
  %1386 = vmatpush1.bf16.msra.mxu0 0
  %1387 = vmatprep.subr.bf16.mxu0 0
  %1388 = vmatpush1.bf16.msra.mxu0 0
  %1389 = vmatprep.subr.bf16.mxu0 0
  %1390 = vmatpush1.bf16.msra.mxu0 %v832
  %1391 = vmatprep.subr.bf16.mxu0 0
  %1392 = vmatpush1.bf16.msra.mxu0 %v831
  %1393 = vmatprep.subr.bf16.mxu0 0
  %1394 = vmatpush2.bf16.msra.mxu0 0
  %1395 = vmatprep.subr.bf16.mxu0 0
  %1396 = vmatpush2.bf16.msra.mxu0 0
  %1397 = vmatprep.subr.bf16.mxu0 0
  %1398 = vmatpush2.bf16.msra.mxu0 0
  %1399 = vmatprep.subr.bf16.mxu0 0
  %1400 = vmatpush2.bf16.msra.mxu0 0
  %1401 = vmatprep.subr.bf16.mxu0 0
  %1402 = vmatpush2.bf16.msra.mxu0 0
  %1403 = vmatprep.subr.bf16.mxu0 0
  %1404 = vmatpush2.bf16.msra.mxu0 0
  %1405 = vmatprep.subr.bf16.mxu0 0
  %1406 = vmatpush2.bf16.msra.mxu0 0
  %1407 = vmatprep.subr.bf16.mxu0 0
  %1408 = vmatpush2.bf16.msra.mxu0 0
  %1409 = vmatprep.mubr.bf16.mxu0 0
  %1410 = vmatmul.mubr.bf16.gmra.mxu0 %v1375
  %v1411 = vpop.f32.mrf.mxu0
  %v1412 = vadd.f32 0.0, %v1411
  %v1413 = vpop.f32.mrf.mxu0
  %v1414 = vpop.f32.mrf.mxu0
  %v1415 = vpop.f32.mrf.mxu0
  %1416 = vdwg.mxu0
  %v1418 = vrot.slane %v1412, 2
  %v1420 = vadd.f32 %v820, %v1418
  %v1421 = vxor.u32 %v1420, 2147483648
  %v1422 = vmul.f32 %v1421, 1.442695
  %v1423 = vpow.pop %v1422
  %v1424 = vadd.f32 %v1423, 1.0
  %v1425 = vrcp.pop %v1424
  %v1426 = vmul.f32 1.0, %v1425
  %v1427 = vtanh.pop %v1420
  %v1429 = vrot.slane %v1362, 6
  %v1431 = vmul.f32 %v1426, %v1429
  %1433 = vrot.lane.b32.xlu0 %v1427, 64
  %v1434 = vpop.permute.xlu0 %1433
  %v1436 = vmul.f32 %v1426, %v1434
  %1438 = vrot.lane.b32.xlu0 %v1436, 32
  %v1439 = vpop.permute.xlu0 %1438
  %v1441 = vadd.f32 %v1431, %v1439
  %v1442 = vtanh.pop %v1441
  %1444 = vrot.lane.b32.xlu0 %v1442, 64
  %v1445 = vpop.permute.xlu0 %1444
  %v1447 = vmul.f32 %v1426, %v1445
  %v1448 = vpack.c.bf16 %v1447, %v1447
  %v1449 = vld [vmem:[%s7] sm:$0xf]
  %v1450 = vld [vmem:[%s7 + $0x4] sm:$0xf]
  %v1451 = vld [vmem:[%s7 + $0x8] sm:$0xf]
  %v1452 = vld [vmem:[%s7 + $0xc] sm:$0xf]
  %v1453 = vld [vmem:[%s8] sm:$0x1]
  %v1455 = vlaneseq
  %v1456 = vshrl.u32 %v1455, 7
  %v1457 = vsub.s32 0, %v1456
  %v1458 = vrot.slane %v1453, %v1457
  %v1461 = vrot.slane %v1448, 3
  %1462 = vrot.lane.b32.xlu0 %v1461, 32
  %v1463 = vpop.permute.xlu0 %1462
  %v1468 = vunpack.c.l.b16 %v1449
  %v1469 = vunpack.c.l.b16 %v1450
  %v1470 = vunpack.c.l.b16 %v1451
  %v1471 = vunpack.c.l.b16 %v1452
  %v1472 = vpack.c.b16 %v1469, %v1468
  %v1473 = vpack.c.b16 %v1471, %v1470
  %v1477 = vsel %vm123, %v1463, 0
  %1479 = vmatprep.subr.bf16.mxu0 0
  %1480 = vmatpush1.bf16.msra.mxu0 0
  %1481 = vmatprep.subr.bf16.mxu0 0
  %1482 = vmatpush1.bf16.msra.mxu0 0
  %1483 = vmatprep.subr.bf16.mxu0 0
  %1484 = vmatpush1.bf16.msra.mxu0 0
  %1485 = vmatprep.subr.bf16.mxu0 0
  %1486 = vmatpush1.bf16.msra.mxu0 0
  %1487 = vmatprep.subr.bf16.mxu0 0
  %1488 = vmatpush1.bf16.msra.mxu0 0
  %1489 = vmatprep.subr.bf16.mxu0 0
  %1490 = vmatpush1.bf16.msra.mxu0 0
  %1491 = vmatprep.subr.bf16.mxu0 0
  %1492 = vmatpush1.bf16.msra.mxu0 %v1473
  %1493 = vmatprep.subr.bf16.mxu0 0
  %1494 = vmatpush1.bf16.msra.mxu0 %v1472
  %1495 = vmatprep.subr.bf16.mxu0 0
  %1496 = vmatpush2.bf16.msra.mxu0 0
  %1497 = vmatprep.subr.bf16.mxu0 0
  %1498 = vmatpush2.bf16.msra.mxu0 0
  %1499 = vmatprep.subr.bf16.mxu0 0
  %1500 = vmatpush2.bf16.msra.mxu0 0
  %1501 = vmatprep.subr.bf16.mxu0 0
  %1502 = vmatpush2.bf16.msra.mxu0 0
  %1503 = vmatprep.subr.bf16.mxu0 0
  %1504 = vmatpush2.bf16.msra.mxu0 0
  %1505 = vmatprep.subr.bf16.mxu0 0
  %1506 = vmatpush2.bf16.msra.mxu0 0
  %1507 = vmatprep.subr.bf16.mxu0 0
  %1508 = vmatpush2.bf16.msra.mxu0 0
  %1509 = vmatprep.subr.bf16.mxu0 0
  %1510 = vmatpush2.bf16.msra.mxu0 0
  %1511 = vmatprep.mubr.bf16.mxu0 0
  %1512 = vmatmul.mubr.bf16.gmra.mxu0 %v1477
  %v1513 = vpop.f32.mrf.mxu0
  %v1514 = vadd.f32 %v1458, %v1513
  %v1515 = vpop.f32.mrf.mxu0
  %v1516 = vpop.f32.mrf.mxu0
  %v1517 = vpop.f32.mrf.mxu0
  %1518 = vdwg.mxu0
  %vm1519 = vcmp.gt.f32.partialorder %v1514, 0.0
  %v1520 = vmin.f32 %v1514, 0.0
  %v1521 = vmul.f32 %v1520, 0.5
  %v1522 = vtanh.pop %v1521
  %v1523 = vmul.f32 %v1522, 2.0
  %v1524 = vsub.f32 1.0, %v1522
  %v1525 = vrcp.pop %v1524
  %v1526 = vmul.f32 %v1523, %v1525
  %v1527 = vsel %vm1519, %v1514, %v1526
  %v1528 = vpack.c.bf16 %v1527, %v1527
  %v1529 = vld [vmem:[%s9] sm:$0xf]
  %v1530 = vld [vmem:[%s9 + $0x4] sm:$0xf]
  %v1531 = vld [vmem:[%s9 + $0x8] sm:$0xf]
  %v1532 = vld [vmem:[%s9 + $0xc] sm:$0xf]
  %v1533 = vld [vmem:[%s10] sm:$0x1]
  %v1535 = vlaneseq
  %v1536 = vshrl.u32 %v1535, 7
  %v1537 = vsub.s32 0, %v1536
  %v1538 = vrot.slane %v1533, %v1537
  %v1544 = vunpack.c.l.b16 %v1529
  %v1545 = vunpack.c.l.b16 %v1530
  %v1546 = vunpack.c.l.b16 %v1531
  %v1547 = vunpack.c.l.b16 %v1532
  %v1548 = vpack.c.b16 %v1545, %v1544
  %v1549 = vpack.c.b16 %v1547, %v1546
  %v1553 = vsel %vm123, %v1528, 0
  %1555 = vmatprep.subr.bf16.mxu0 0
  %1556 = vmatpush1.bf16.msra.mxu0 0
  %1557 = vmatprep.subr.bf16.mxu0 0
  %1558 = vmatpush1.bf16.msra.mxu0 0
  %1559 = vmatprep.subr.bf16.mxu0 0
  %1560 = vmatpush1.bf16.msra.mxu0 0
  %1561 = vmatprep.subr.bf16.mxu0 0
  %1562 = vmatpush1.bf16.msra.mxu0 0
  %1563 = vmatprep.subr.bf16.mxu0 0
  %1564 = vmatpush1.bf16.msra.mxu0 0
  %1565 = vmatprep.subr.bf16.mxu0 0
  %1566 = vmatpush1.bf16.msra.mxu0 0
  %1567 = vmatprep.subr.bf16.mxu0 0
  %1568 = vmatpush1.bf16.msra.mxu0 %v1549
  %1569 = vmatprep.subr.bf16.mxu0 0
  %1570 = vmatpush1.bf16.msra.mxu0 %v1548
  %1571 = vmatprep.subr.bf16.mxu0 0
  %1572 = vmatpush2.bf16.msra.mxu0 0
  %1573 = vmatprep.subr.bf16.mxu0 0
  %1574 = vmatpush2.bf16.msra.mxu0 0
  %1575 = vmatprep.subr.bf16.mxu0 0
  %1576 = vmatpush2.bf16.msra.mxu0 0
  %1577 = vmatprep.subr.bf16.mxu0 0
  %1578 = vmatpush2.bf16.msra.mxu0 0
  %1579 = vmatprep.subr.bf16.mxu0 0
  %1580 = vmatpush2.bf16.msra.mxu0 0
  %1581 = vmatprep.subr.bf16.mxu0 0
  %1582 = vmatpush2.bf16.msra.mxu0 0
  %1583 = vmatprep.subr.bf16.mxu0 0
  %1584 = vmatpush2.bf16.msra.mxu0 0
  %1585 = vmatprep.subr.bf16.mxu0 0
  %1586 = vmatpush2.bf16.msra.mxu0 0
  %1587 = vmatprep.mubr.bf16.mxu0 0
  %1588 = vmatmul.mubr.bf16.gmra.mxu0 %v1553
  %v1589 = vpop.f32.mrf.mxu0
  %v1590 = vadd.f32 %v1538, %v1589
  %v1591 = vpop.f32.mrf.mxu0
  %v1592 = vpop.f32.mrf.mxu0
  %v1593 = vpop.f32.mrf.mxu0
  %1594 = vdwg.mxu0
  %vm1595 = vcmp.gt.f32.partialorder %v1590, 0.0
  %v1596 = vmin.f32 %v1590, 0.0
  %v1597 = vmul.f32 %v1596, 0.5
  %v1598 = vtanh.pop %v1597
  %v1599 = vmul.f32 %v1598, 2.0
  %v1600 = vsub.f32 1.0, %v1598
  %v1601 = vrcp.pop %v1600
  %v1602 = vmul.f32 %v1599, %v1601
  %v1603 = vsel %vm1595, %v1590, %v1602
  %v1604 = vpack.c.bf16 %v1603, %v1603
  %v1605 = vld [vmem:[%s11] sm:$0xf]
  %v1606 = vld [vmem:[%s11 + $0x4] sm:$0xf]
  %v1607 = vld [vmem:[#allocation2] sm:$0x1]
  %v1609 = vlaneseq
  %v1610 = vshrl.u32 %v1609, 7
  %v1611 = vsub.s32 0, %v1610
  %v1612 = vrot.slane %v1607, %v1611
  %v1616 = vunpack.c.l.b16 %v1605
  %v1617 = vunpack.c.l.b16 %v1606
  %v1618 = vpack.c.b16 %v1617, %v1616
  %vm1620 = vcmask 130048
  %v1622 = vsel %vm1620, %v1604, 0
  %1624 = vmatprep.subr.bf16.mxu0 0
  %1625 = vmatpush1.bf16.msra.mxu0 0
  %1626 = vmatprep.subr.bf16.mxu0 0
  %1627 = vmatpush1.bf16.msra.mxu0 0
  %1628 = vmatprep.subr.bf16.mxu0 0
  %1629 = vmatpush1.bf16.msra.mxu0 0
  %1630 = vmatprep.subr.bf16.mxu0 0
  %1631 = vmatpush1.bf16.msra.mxu0 0
  %1632 = vmatprep.subr.bf16.mxu0 0
  %1633 = vmatpush1.bf16.msra.mxu0 0
  %1634 = vmatprep.subr.bf16.mxu0 0
  %1635 = vmatpush1.bf16.msra.mxu0 0
  %1636 = vmatprep.subr.bf16.mxu0 0
  %1637 = vmatpush1.bf16.msra.mxu0 0
  %1638 = vmatprep.subr.bf16.mxu0 0
  %1639 = vmatpush1.bf16.msra.mxu0 %v1618
  %1640 = vmatprep.subr.bf16.mxu0 0
  %1641 = vmatpush2.bf16.msra.mxu0 0
  %1642 = vmatprep.subr.bf16.mxu0 0
  %1643 = vmatpush2.bf16.msra.mxu0 0
  %1644 = vmatprep.subr.bf16.mxu0 0
  %1645 = vmatpush2.bf16.msra.mxu0 0
  %1646 = vmatprep.subr.bf16.mxu0 0
  %1647 = vmatpush2.bf16.msra.mxu0 0
  %1648 = vmatprep.subr.bf16.mxu0 0
  %1649 = vmatpush2.bf16.msra.mxu0 0
  %1650 = vmatprep.subr.bf16.mxu0 0
  %1651 = vmatpush2.bf16.msra.mxu0 0
  %1652 = vmatprep.subr.bf16.mxu0 0
  %1653 = vmatpush2.bf16.msra.mxu0 0
  %1654 = vmatprep.subr.bf16.mxu0 0
  %1655 = vmatpush2.bf16.msra.mxu0 0
  %1656 = vmatprep.mubr.bf16.mxu0 0
  %1657 = vmatmul.mubr.bf16.gmra.mxu0 %v1622
  %v1658 = vpop.f32.mrf.mxu0
  %v1659 = vadd.f32 %v1612, %v1658
  %v1660 = vpop.f32.mrf.mxu0
  %v1661 = vpop.f32.mrf.mxu0
  %v1662 = vpop.f32.mrf.mxu0
  %1663 = vdwg.mxu0
  %vm1664 = vcmask 1024
  %1665 = vst.msk [vmem:[%s13] sm:$0x3] %vm1664, %v1659
  // Predicated region
  $region54: #{rnn_forward.1} parent=0 // pred_check
    _
  $region55: #{rnn_forward.1} parent=0 // pred_check_branch
    %1667 = sbr.rel (0) target = $region57
  $region56: #{rnn_forward.1} parent=0 // pred_region
    _
  $region57: #{rnn_forward.1} parent=0 // pred_fallthru
    _
  // Predicated region
  $region58: #{rnn_forward.1} parent=0 // pred_check
    _
  $region59: #{rnn_forward.1} parent=0 // pred_check_branch
    %1669 = sbr.rel (0) target = $region61
  $region60: #{rnn_forward.1} parent=0 // pred_region
    _
  $region61: #{rnn_forward.1} parent=0 // pred_fallthru
    _

</llo_original>
